<compile_context>
chip_gen: v7x
topology: tpu7x:2x2x1
jax: 0.10.0
libtpu: 0.0.40
codegen_flags: <defaults>
</compile_context>

<pallas_src>
import functools

import jax
import jax.numpy as jnp
from jax.experimental import pallas as pl
from jax.experimental.pallas import tpu as pltpu

_LANE = 128       # lane width / lane-dense output padding
_HEAD_PAD = 128   # per-head padding of the fused cls|reg RoI-head output


def _round_up(x, m):
    return ((x + m - 1) // m) * m


def _pick_tm(M, tm):
    """Tile M; guarantee >=2 M tiles when possible (v7x dual-TC utilization)."""
    tm = min(tm, _round_up(M, 8))
    Mp = _round_up(M, tm)
    while Mp // tm < 2 and tm > 8:
        tm = max(8, tm // 2)
        Mp = _round_up(M, tm)
    return tm, Mp


# ----------------------------------------------------------------------------
# Pallas kernel 1: single-pass matmul + bias (+ ReLU), weight VMEM-resident.
#   bf16 MXU operands, f32 accumulate, lane-dense (128-padded) output.
# ----------------------------------------------------------------------------
def _matmul_bias_kernel(x_ref, w_ref, b_ref, o_ref, *, relu):
    out = jnp.dot(x_ref[...], w_ref[...], preferred_element_type=jnp.float32)
    out = out + b_ref[...]                      # (1, tn) broadcast over rows
    if relu:
        out = jnp.maximum(out, 0.0)
    o_ref[...] = out.astype(o_ref.dtype)


def matmul_bias(x, w, b, *, relu=False, out_dtype=jnp.float32, tm=256):
    """x: (M, K), w: (K, N), b: (N,) -> (M, N) in out_dtype.

    No K grid axis / accumulator: the full (K, 128) weight tile rides along in
    VMEM.  x is passed with its true K (no padded HBM copy); only the tiny
    weight/bias are lane-padded.
    """
    M, K = x.shape
    K2, N = w.shape
    assert K == K2
    Np = _round_up(N, _LANE)
    tm, Mp = _pick_tm(M, tm)

    xb = x.astype(jnp.bfloat16)
    if Mp != M:
        xb = jnp.pad(xb, ((0, Mp - M), (0, 0)))
    wb = jnp.pad(w, ((0, 0), (0, Np - N))).astype(jnp.bfloat16)
    br = jnp.pad(b.reshape(1, N).astype(jnp.float32), ((0, 0), (0, Np - N)))

    grid = (Mp // tm, Np // _LANE)
    cost = pl.CostEstimate(
        flops=2 * Mp * Np * K,
        transcendentals=0,
        bytes_accessed=(xb.size * 2 + wb.size * 2 + br.size * 4
                        + Mp * Np * jnp.dtype(out_dtype).itemsize),
    )

    out = pl.pallas_call(
        functools.partial(_matmul_bias_kernel, relu=relu),
        out_shape=jax.ShapeDtypeStruct((Mp, Np), out_dtype),
        grid_spec=pltpu.PrefetchScalarGridSpec(
            num_scalar_prefetch=0,
            grid=grid,
            in_specs=[
                pl.BlockSpec((tm, K), lambda i, j: (i, 0)),
                pl.BlockSpec((K, _LANE), lambda i, j: (0, j)),
                pl.BlockSpec((1, _LANE), lambda i, j: (0, j)),
            ],
            out_specs=pl.BlockSpec((tm, _LANE), lambda i, j: (i, j)),
        ),
        compiler_params=pltpu.CompilerParams(
            dimension_semantics=("parallel", "parallel"),
            vmem_limit_bytes=32 * 1024 * 1024,
        ),
        cost_estimate=cost,
    )(xb, wb, br)
    return out[:M, :N]


# ----------------------------------------------------------------------------
# Pallas kernel 2: fused RPN = 3x3 conv matmul -> +bias -> ReLU ->
#   fused [score|loc] 1x1 head matmul -> +bias.  rpn_mid never leaves VMEM.
# ----------------------------------------------------------------------------
def _rpn_fused_kernel(x_ref, w1_ref, b1_ref, w2_ref, b2_ref, o_ref):
    h = jnp.dot(x_ref[...], w1_ref[...], preferred_element_type=jnp.float32)
    h = jnp.maximum(h + b1_ref[...], 0.0)
    out = jnp.dot(h.astype(w2_ref.dtype), w2_ref[...],
                  preferred_element_type=jnp.float32) + b2_ref[...]
    o_ref[...] = out.astype(o_ref.dtype)


def rpn_fused(cols, w1, b1, w2, b2, *, tm=256):
    """cols: (M, K) im2col of the backbone feature map (bf16).
    w1: (K, H1P) conv weight, w2: (H1P, N2P) fused score|loc head weight
    (both bf16, lane-padded).  Returns (M, N2P) f32."""
    M, K = cols.shape
    H1p = w1.shape[1]
    N2p = w2.shape[1]
    tm, Mp = _pick_tm(M, tm)

    xb = cols.astype(jnp.bfloat16)
    if Mp != M:
        xb = jnp.pad(xb, ((0, Mp - M), (0, 0)))

    cost = pl.CostEstimate(
        flops=2 * Mp * (H1p * K + N2p * H1p),
        transcendentals=0,
        bytes_accessed=(xb.size * 2 + w1.size * 2 + w2.size * 2
                        + (b1.size + b2.size) * 4 + Mp * N2p * 4),
    )

    out = pl.pallas_call(
        _rpn_fused_kernel,
        out_shape=jax.ShapeDtypeStruct((Mp, N2p), jnp.float32),
        grid_spec=pltpu.PrefetchScalarGridSpec(
            num_scalar_prefetch=0,
            grid=(Mp // tm,),
            in_specs=[
                pl.BlockSpec((tm, K), lambda i: (i, 0)),
                pl.BlockSpec((K, H1p), lambda i: (0, 0)),
                pl.BlockSpec((1, H1p), lambda i: (0, 0)),
                pl.BlockSpec((H1p, N2p), lambda i: (0, 0)),
                pl.BlockSpec((1, N2p), lambda i: (0, 0)),
            ],
            out_specs=pl.BlockSpec((tm, N2p), lambda i: (i, 0)),
        ),
        compiler_params=pltpu.CompilerParams(
            dimension_semantics=("parallel",),
            vmem_limit_bytes=32 * 1024 * 1024,
        ),
        cost_estimate=cost,
    )(xb, w1, b1, w2, b2)
    return out[:M]


# ----------------------------------------------------------------------------
# Pallas kernel 3: fully fused RoI head
#   fc1 -> ReLU -> [cls | reg] -> delta de-normalization (o = o*std + mean)
#   (cls half gets std=1, mean=0, so only the reg half is de-normalized)
# ----------------------------------------------------------------------------
def _roi_head_kernel(x_ref, w1_ref, b1_ref, w2_ref, b2_ref,
                     std_ref, mean_ref, o_ref):
    h = jnp.dot(x_ref[...], w1_ref[...], preferred_element_type=jnp.float32)
    h = jnp.maximum(h + b1_ref[...], 0.0)
    out = jnp.dot(h.astype(w2_ref.dtype), w2_ref[...],
                  preferred_element_type=jnp.float32) + b2_ref[...]
    o_ref[...] = out * std_ref[...] + mean_ref[...]   # fused denorm epilogue


def roi_head_fused(x, w1, b1, w2, b2, std_row, mean_row):
    """x: (R, Kin) -> (R, 2*_HEAD_PAD) f32 with cls in [:,:128], reg in [:,128:]."""
    R, Kin = x.shape
    H1 = w1.shape[1]
    N2 = w2.shape[1]
    Rp = _round_up(R, 8)

    xb = x.astype(jnp.bfloat16)
    if Rp != R:
        xb = jnp.pad(xb, ((0, Rp - R), (0, 0)))

    out = pl.pallas_call(
        _roi_head_kernel,
        out_shape=jax.ShapeDtypeStruct((Rp, N2), jnp.float32),
        grid=(1,),
        in_specs=[
            pl.BlockSpec((Rp, Kin), lambda i: (0, 0)),
            pl.BlockSpec((Kin, H1), lambda i: (0, 0)),
            pl.BlockSpec((1, H1), lambda i: (0, 0)),
            pl.BlockSpec((H1, N2), lambda i: (0, 0)),
            pl.BlockSpec((1, N2), lambda i: (0, 0)),
            pl.BlockSpec((1, N2), lambda i: (0, 0)),
            pl.BlockSpec((1, N2), lambda i: (0, 0)),
        ],
        out_specs=pl.BlockSpec((Rp, N2), lambda i: (0, 0)),
        compiler_params=pltpu.CompilerParams(
            dimension_semantics=("arbitrary",)),
    )(xb, w1, b1, w2, b2, std_row, mean_row)
    return out[:R]


# ----------------------------------------------------------------------------
# Glue: bf16 im2col (3x3 same padding, NHWC), fixed-quadrant RoI pooling
# ----------------------------------------------------------------------------
def im2col_3x3(x):
    """x: (B, H, W, C) -> (B*H*W, 9*C) bf16, patch order (ky, kx, cin)."""
    B, H, W, C = x.shape
    xb = x.astype(jnp.bfloat16)
    xp = jnp.pad(xb, ((0, 0), (1, 1), (1, 1), (0, 0)))
    cols = jnp.concatenate(
        [xp[:, ky:ky + H, kx:kx + W, :] for ky in range(3) for kx in range(3)],
        axis=-1)                                    # (B, H, W, 9*C)
    return cols.reshape(B * H * W, 9 * C)


def roi_pool_quadrants(feat, roi_pool):
    """Glue: 4 fixed quadrant RoIs per image, adaptive 2x2 average pool (f32)."""
    B, H, W, F = feat.shape
    f = feat.astype(jnp.float32)
    h2, w2 = H // 2, W // 2
    rois = []
    for qy in range(2):
        for qx in range(2):
            q = f[:, qy * h2:(qy + 1) * h2, qx * w2:(qx + 1) * w2, :]
            p = q.reshape(B, roi_pool, h2 // roi_pool,
                          roi_pool, w2 // roi_pool, F)
            rois.append(p.mean(axis=(2, 4)))        # (B, 2, 2, F)
    pooled = jnp.stack(rois, axis=1)                # (B, 4, 2, 2, F)
    return pooled.reshape(B * 4, roi_pool * roi_pool * F)


# ----------------------------------------------------------------------------
# Forward pass (jit-wrapped so pad/cast/im2col glue fuses around the kernels)
# ----------------------------------------------------------------------------
def faster_rcnn_forward(p, x, *, n_class, n_anchor, roi_pool):
    B, H, W, _ = x.shape
    feat_c = p["w_ext"].shape[-1]

    # extractor backbone: 3x3 conv + ReLU, bf16 output (next stages eat bf16)
    cols0 = im2col_3x3(x)
    feat = matmul_bias(cols0, p["w_ext"].reshape(-1, feat_c), p["b_ext"],
                       relu=True, out_dtype=jnp.bfloat16)
    feat = feat.reshape(B, H, W, feat_c)

    # RPN: one fused pallas_call (3x3 conv -> ReLU -> [score|loc] 1x1 heads)
    cols1 = im2col_3x3(feat)
    rpn_heads = rpn_fused(cols1, p["w_rpn"], p["b_rpn"],
                          p["w_rpn_heads"], p["b_rpn_heads"])
    rpn_heads = rpn_heads.reshape(B, H, W, -1)
    rpn_scores = rpn_heads[..., :n_anchor * 2]
    rpn_locs = rpn_heads[..., n_anchor * 2:n_anchor * 6]

    # RoI head: fixed-quadrant pooling (glue) + fully fused FC head kernel
    roi_feats = roi_pool_quadrants(feat, roi_pool)
    roi_out = roi_head_fused(roi_feats, p["w_fc1"], p["b_fc1"],
                             p["w_head2"], p["b_head2"],
                             p["head_std"], p["head_mean"])
    roi_cls_logits = roi_out[:, :n_class]
    roi_deltas = roi_out[:, _HEAD_PAD:_HEAD_PAD + n_class * 4]
    roi_probs = jax.nn.softmax(roi_cls_logits, axis=-1)   # glue (5-wide)
    # TODO(synk): per-class score_thresh filtering + NMS not implemented.
    return rpn_scores, rpn_locs, roi_probs, roi_deltas


class FasterRCNNPallas:
    def __init__(self, key,
                 c_in=4, feat=32, rpn_mid=32, n_anchor=3,
                 n_class=5, roi_pool=2, fc_hidden=64,
                 delta_normalize_mean=(0.0, 0.0, 0.0, 0.0),
                 delta_normalize_std=(0.1, 0.1, 0.2, 0.2)):
        self.n_class = n_class
        self.n_anchor = n_anchor
        self.roi_pool = roi_pool
        self.nms_thresh = 0.3
        self.score_thresh = 0.05

        ks = jax.random.split(key, 8)
        s = 0.05
        f32, bf16 = jnp.float32, jnp.bfloat16

        h1p = _round_up(rpn_mid, _LANE)       # RPN mid channels, lane-padded
        n2p = _round_up(n_anchor * 6, _LANE)  # fused score|loc head width
        fcp = _round_up(fc_hidden, _LANE)     # RoI fc hidden, lane-padded

        # extractor: one 3x3 conv backbone (kept raw; wrapper pads its N)
        w_ext = jax.random.normal(ks[0], (3, 3, c_in, feat), f32) * s
        b_ext = jnp.zeros((feat,), f32)

        # RPN 3x3 conv: pad Cout -> 128 so the in-kernel intermediate h is
        # lane-dense and the head matmul contraction is K=128.
        w_rpn = jax.random.normal(ks[1], (3, 3, feat, rpn_mid), f32) * s
        w_rpn = jnp.pad(w_rpn, ((0, 0), (0, 0), (0, 0), (0, h1p - rpn_mid)))
        w_rpn = w_rpn.reshape(9 * feat, h1p).astype(bf16)
        b_rpn = jnp.pad(jnp.zeros((rpn_mid,), f32),
                        (0, h1p - rpn_mid)).reshape(1, h1p)

        # RPN 1x1 score / loc heads fused into one lane-padded weight
        w_rpn_score = jax.random.normal(ks[2], (rpn_mid, n_anchor * 2), f32) * s
        w_rpn_loc = jax.random.normal(ks[3], (rpn_mid, n_anchor * 4), f32) * s
        w_heads = jnp.concatenate([w_rpn_score, w_rpn_loc], axis=1)  # (mid, 6A)
        w_heads = jnp.pad(w_heads, ((0, h1p - rpn_mid),
                                    (0, n2p - n_anchor * 6)))
        w_rpn_heads = w_heads.astype(bf16)
        b_rpn_heads = jnp.zeros((1, n2p), f32)

        # RoI head: fc1 (hidden padded to 128) -> (cls | reg), 2*128 output
        fc_in = feat * roi_pool * roi_pool
        w_fc1 = jax.random.normal(ks[4], (fc_in, fc_hidden), f32) * s
        w_fc1 = jnp.pad(w_fc1, ((0, 0), (0, fcp - fc_hidden))).astype(bf16)
        b_fc1 = jnp.pad(jnp.zeros((fc_hidden,), f32),
                        (0, fcp - fc_hidden)).reshape(1, fcp)

        w_cls = jax.random.normal(ks[5], (fc_hidden, n_class), f32) * s
        b_cls = jnp.zeros((n_class,), f32)
        w_reg = jax.random.normal(ks[6], (fc_hidden, n_class * 4), f32) * s
        b_reg = jnp.zeros((n_class * 4,), f32)

        w_head2 = jnp.concatenate(
            [jnp.pad(w_cls, ((0, 0), (0, _HEAD_PAD - n_class))),
             jnp.pad(w_reg, ((0, 0), (0, _HEAD_PAD - 4 * n_class)))], axis=1)
        w_head2 = jnp.pad(w_head2, ((0, fcp - fc_hidden), (0, 0))).astype(bf16)
        b_head2 = jnp.concatenate(
            [jnp.pad(b_cls, (0, _HEAD_PAD - n_class)),
             jnp.pad(b_reg, (0, _HEAD_PAD - 4 * n_class))],
            axis=0).reshape(1, 2 * _HEAD_PAD)

        # de-normalization constants, tiled per class; cls half is identity
        std_row = jnp.tile(jnp.asarray(delta_normalize_std, f32), (n_class,))
        mean_row = jnp.tile(jnp.asarray(delta_normalize_mean, f32), (n_class,))
        head_std = jnp.concatenate(
            [jnp.ones((_HEAD_PAD,), f32),
             jnp.pad(std_row, (0, _HEAD_PAD - 4 * n_class),
                     constant_values=1.0)]).reshape(1, 2 * _HEAD_PAD)
        head_mean = jnp.concatenate(
            [jnp.zeros((_HEAD_PAD,), f32),
             jnp.pad(mean_row, (0, _HEAD_PAD - 4 * n_class))]
        ).reshape(1, 2 * _HEAD_PAD)

        self.params = dict(
            w_ext=w_ext, b_ext=b_ext,
            w_rpn=w_rpn, b_rpn=b_rpn,
            w_rpn_heads=w_rpn_heads, b_rpn_heads=b_rpn_heads,
            w_fc1=w_fc1, b_fc1=b_fc1,
            w_head2=w_head2, b_head2=b_head2,
            head_std=head_std, head_mean=head_mean,
        )
        self._forward = jax.jit(functools.partial(
            faster_rcnn_forward, n_class=n_class, n_anchor=n_anchor,
            roi_pool=roi_pool))

    def __call__(self, x):
        return self._forward(self.params, x)


if __name__ == "__main__":
    key = jax.random.PRNGKey(0)
    k_param, k_x = jax.random.split(key)

    B, H, W, C = 2, 16, 16, 4
    x = jax.random.normal(k_x, (B, H, W, C), jnp.float32)

    model = FasterRCNNPallas(k_param)
    rpn_scores, rpn_locs, roi_probs, roi_deltas = model(x)
    jax.block_until_ready((rpn_scores, rpn_locs, roi_probs, roi_deltas))

    assert rpn_scores.shape == (B, H, W, model.n_anchor * 2)
    assert rpn_locs.shape == (B, H, W, model.n_anchor * 4)
    assert roi_probs.shape == (B * 4, model.n_class)
    assert roi_deltas.shape == (B * 4, model.n_class * 4)
    assert bool(jnp.all(jnp.isfinite(rpn_scores)))
    assert bool(jnp.all(jnp.isfinite(roi_probs)))
    assert bool(jnp.allclose(roi_probs.sum(axis=-1), 1.0, atol=1e-3))
    print("KERNEL_OK")
</pallas_src>

<mosaic_0001>
module attributes {stable_mosaic.version = 11 : i64} {
  func.func @_matmul_bias_kernel(%arg0: i32, %arg1: i32, %arg2: memref<256x36xbf16, #tpu.memory_space<vmem>>, %arg3: memref<36x128xbf16, #tpu.memory_space<vmem>>, %arg4: memref<1x128xf32, #tpu.memory_space<vmem>>, %arg5: memref<256x128xbf16, #tpu.memory_space<vmem>>) attributes {dimension_semantics = [#tpu.dimension_semantics<parallel>, #tpu.dimension_semantics<parallel>], iteration_bounds = array<i64: 2, 1>, scalar_prefetch = 0 : i64, scratch_operands = 0 : i64, tpu.core_type = #tpu.core_type<tc>, window_params = [{transform_indices = @transform_0, window_bounds = array<i64: 256, 36>}, {transform_indices = @transform_1, window_bounds = array<i64: 36, 128>}, {transform_indices = @transform_2, window_bounds = array<i64: 1, 128>}, {transform_indices = @transform_3, window_bounds = array<i64: 256, 128>}]} {
    %c0 = arith.constant 0 : index
    %c0_0 = arith.constant 0 : index
    %0 = vector.load %arg2[%c0, %c0_0] : memref<256x36xbf16, #tpu.memory_space<vmem>>, vector<256x36xbf16>
    %c0_1 = arith.constant 0 : index
    %c0_2 = arith.constant 0 : index
    %1 = vector.load %arg3[%c0_1, %c0_2] : memref<36x128xbf16, #tpu.memory_space<vmem>>, vector<36x128xbf16>
    %cst = arith.constant dense<0.000000e+00> : vector<256x128xf32>
    %2 = tpu.matmul %0, %1, %cst {dimension_numbers = #tpu.dot_dimension_numbers<[1], [0], [0], [1], [0, 0, 1, 1], [], []>} : vector<256x36xbf16>, vector<36x128xbf16>, vector<256x128xf32> -> vector<256x128xf32>
    %c0_3 = arith.constant 0 : index
    %c0_4 = arith.constant 0 : index
    %3 = vector.load %arg4[%c0_3, %c0_4] : memref<1x128xf32, #tpu.memory_space<vmem>>, vector<1x128xf32>
    %4 = vector.broadcast %3 : vector<1x128xf32> to vector<256x128xf32>
    %5 = arith.addf %2, %4 : vector<256x128xf32>
    %cst_5 = arith.constant 0.000000e+00 : f32
    %6 = vector.broadcast %cst_5 : f32 to vector<256x128xf32>
    %7 = arith.maximumf %5, %6 : vector<256x128xf32>
    %8 = arith.truncf %7 : vector<256x128xf32> to vector<256x128xbf16>
    %c0_6 = arith.constant 0 : index
    %c0_7 = arith.constant 0 : index
    %9 = vector.load %arg5[%c0_6, %c0_7] : memref<256x128xbf16, #tpu.memory_space<vmem>>, vector<256x128xbf16>
    tpu.vector_store %arg5[%c0_6, %c0_7], %8 {strides = array<i32>} : memref<256x128xbf16, #tpu.memory_space<vmem>>, vector<256x128xbf16>,
    return
  }
  func.func @transform_0(%arg0: i32, %arg1: i32) -> (i32, i32) {
    %c0_i32 = arith.constant 0 : i32
    %c0_i32_0 = arith.constant 0 : i32
    return %arg0, %c0_i32 : i32, i32
  }
  func.func @transform_1(%arg0: i32, %arg1: i32) -> (i32, i32) {
    %c0_i32 = arith.constant 0 : i32
    %c0_i32_0 = arith.constant 0 : i32
    return %c0_i32, %arg1 : i32, i32
  }
  func.func @transform_2(%arg0: i32, %arg1: i32) -> (i32, i32) {
    %c0_i32 = arith.constant 0 : i32
    %c0_i32_0 = arith.constant 0 : i32
    return %c0_i32, %arg1 : i32, i32
  }
  func.func @transform_3(%arg0: i32, %arg1: i32) -> (i32, i32) {
    %c0_i32 = arith.constant 0 : i32
    return %arg0, %arg1 : i32, i32
  }
}

module attributes {stable_mosaic.version = 11 : i64} {
  func.func @_rpn_fused_kernel(%arg0: i32, %arg1: memref<256x288xbf16, #tpu.memory_space<vmem>>, %arg2: memref<288x128xbf16, #tpu.memory_space<vmem>>, %arg3: memref<1x128xf32, #tpu.memory_space<vmem>>, %arg4: memref<128x128xbf16, #tpu.memory_space<vmem>>, %arg5: memref<1x128xf32, #tpu.memory_space<vmem>>, %arg6: memref<256x128xf32, #tpu.memory_space<vmem>>) attributes {dimension_semantics = [#tpu.dimension_semantics<parallel>], iteration_bounds = array<i64: 2>, scalar_prefetch = 0 : i64, scratch_operands = 0 : i64, tpu.core_type = #tpu.core_type<tc>, window_params = [{transform_indices = @transform_0, window_bounds = array<i64: 256, 288>}, {pipeline_mode = #tpu.pipeline_mode<synchronous>, transform_indices = @transform_1, window_bounds = array<i64: 288, 128>}, {pipeline_mode = #tpu.pipeline_mode<synchronous>, transform_indices = @transform_2, window_bounds = array<i64: 1, 128>}, {pipeline_mode = #tpu.pipeline_mode<synchronous>, transform_indices = @transform_3, window_bounds = array<i64: 128, 128>}, {pipeline_mode = #tpu.pipeline_mode<synchronous>, transform_indices = @transform_4, window_bounds = array<i64: 1, 128>}, {transform_indices = @transform_5, window_bounds = array<i64: 256, 128>}]} {
    %c0 = arith.constant 0 : index
    %c0_0 = arith.constant 0 : index
    %0 = vector.load %arg1[%c0, %c0_0] : memref<256x288xbf16, #tpu.memory_space<vmem>>, vector<256x288xbf16>
    %c0_1 = arith.constant 0 : index
    %c0_2 = arith.constant 0 : index
    %1 = vector.load %arg2[%c0_1, %c0_2] : memref<288x128xbf16, #tpu.memory_space<vmem>>, vector<288x128xbf16>
    %cst = arith.constant dense<0.000000e+00> : vector<256x128xf32>
    %2 = tpu.matmul %0, %1, %cst {dimension_numbers = #tpu.dot_dimension_numbers<[1], [0], [0], [1], [0, 0, 1, 1], [], []>} : vector<256x288xbf16>, vector<288x128xbf16>, vector<256x128xf32> -> vector<256x128xf32>
    %c0_3 = arith.constant 0 : index
    %c0_4 = arith.constant 0 : index
    %3 = vector.load %arg3[%c0_3, %c0_4] : memref<1x128xf32, #tpu.memory_space<vmem>>, vector<1x128xf32>
    %4 = vector.broadcast %3 : vector<1x128xf32> to vector<256x128xf32>
    %5 = arith.addf %2, %4 : vector<256x128xf32>
    %cst_5 = arith.constant 0.000000e+00 : f32
    %6 = vector.broadcast %cst_5 : f32 to vector<256x128xf32>
    %7 = arith.maximumf %5, %6 : vector<256x128xf32>
    %8 = arith.truncf %7 : vector<256x128xf32> to vector<256x128xbf16>
    %c0_6 = arith.constant 0 : index
    %c0_7 = arith.constant 0 : index
    %9 = vector.load %arg4[%c0_6, %c0_7] : memref<128x128xbf16, #tpu.memory_space<vmem>>, vector<128x128xbf16>
    %cst_8 = arith.constant dense<0.000000e+00> : vector<256x128xf32>
    %10 = tpu.matmul %8, %9, %cst_8 {dimension_numbers = #tpu.dot_dimension_numbers<[1], [0], [0], [1], [0, 0, 1, 1], [], []>} : vector<256x128xbf16>, vector<128x128xbf16>, vector<256x128xf32> -> vector<256x128xf32>
    %c0_9 = arith.constant 0 : index
    %c0_10 = arith.constant 0 : index
    %11 = vector.load %arg5[%c0_9, %c0_10] : memref<1x128xf32, #tpu.memory_space<vmem>>, vector<1x128xf32>
    %12 = vector.broadcast %11 : vector<1x128xf32> to vector<256x128xf32>
    %13 = arith.addf %10, %12 : vector<256x128xf32>
    %c0_11 = arith.constant 0 : index
    %c0_12 = arith.constant 0 : index
    %14 = vector.load %arg6[%c0_11, %c0_12] : memref<256x128xf32, #tpu.memory_space<vmem>>, vector<256x128xf32>
    tpu.vector_store %arg6[%c0_11, %c0_12], %13 {strides = array<i32>} : memref<256x128xf32, #tpu.memory_space<vmem>>, vector<256x128xf32>,
    return
  }
  func.func @transform_0(%arg0: i32) -> (i32, i32) {
    %c0_i32 = arith.constant 0 : i32
    %c0_i32_0 = arith.constant 0 : i32
    return %arg0, %c0_i32 : i32, i32
  }
  func.func @transform_1(%arg0: i32) -> (i32, i32) {
    %c0_i32 = arith.constant 0 : i32
    %c0_i32_0 = arith.constant 0 : i32
    %c0_i32_1 = arith.constant 0 : i32
    return %c0_i32, %c0_i32_0 : i32, i32
  }
  func.func @transform_2(%arg0: i32) -> (i32, i32) {
    %c0_i32 = arith.constant 0 : i32
    %c0_i32_0 = arith.constant 0 : i32
    %c0_i32_1 = arith.constant 0 : i32
    return %c0_i32, %c0_i32_0 : i32, i32
  }
  func.func @transform_3(%arg0: i32) -> (i32, i32) {
    %c0_i32 = arith.constant 0 : i32
    %c0_i32_0 = arith.constant 0 : i32
    %c0_i32_1 = arith.constant 0 : i32
    return %c0_i32, %c0_i32_0 : i32, i32
  }
  func.func @transform_4(%arg0: i32) -> (i32, i32) {
    %c0_i32 = arith.constant 0 : i32
    %c0_i32_0 = arith.constant 0 : i32
    %c0_i32_1 = arith.constant 0 : i32
    return %c0_i32, %c0_i32_0 : i32, i32
  }
  func.func @transform_5(%arg0: i32) -> (i32, i32) {
    %c0_i32 = arith.constant 0 : i32
    %c0_i32_0 = arith.constant 0 : i32
    return %arg0, %c0_i32 : i32, i32
  }
}

module attributes {stable_mosaic.version = 11 : i64} {
  func.func @_roi_head_kernel(%arg0: i32, %arg1: memref<8x128xbf16, #tpu.memory_space<vmem>>, %arg2: memref<128x128xbf16, #tpu.memory_space<vmem>>, %arg3: memref<1x128xf32, #tpu.memory_space<vmem>>, %arg4: memref<128x256xbf16, #tpu.memory_space<vmem>>, %arg5: memref<1x256xf32, #tpu.memory_space<vmem>>, %arg6: memref<1x256xf32, #tpu.memory_space<vmem>>, %arg7: memref<1x256xf32, #tpu.memory_space<vmem>>, %arg8: memref<8x256xf32, #tpu.memory_space<vmem>>) attributes {dimension_semantics = [#tpu.dimension_semantics<arbitrary>], iteration_bounds = array<i64: 1>, scalar_prefetch = 0 : i64, scratch_operands = 0 : i64, tpu.core_type = #tpu.core_type<tc>, window_params = [{pipeline_mode = #tpu.pipeline_mode<synchronous>, transform_indices = @transform_0, window_bounds = array<i64: 8, 128>}, {pipeline_mode = #tpu.pipeline_mode<synchronous>, transform_indices = @transform_1, window_bounds = array<i64: 128, 128>}, {pipeline_mode = #tpu.pipeline_mode<synchronous>, transform_indices = @transform_2, window_bounds = array<i64: 1, 128>}, {pipeline_mode = #tpu.pipeline_mode<synchronous>, transform_indices = @transform_3, window_bounds = array<i64: 128, 256>}, {pipeline_mode = #tpu.pipeline_mode<synchronous>, transform_indices = @transform_4, window_bounds = array<i64: 1, 256>}, {pipeline_mode = #tpu.pipeline_mode<synchronous>, transform_indices = @transform_5, window_bounds = array<i64: 1, 256>}, {pipeline_mode = #tpu.pipeline_mode<synchronous>, transform_indices = @transform_6, window_bounds = array<i64: 1, 256>}, {pipeline_mode = #tpu.pipeline_mode<synchronous>, transform_indices = @transform_7, window_bounds = array<i64: 8, 256>}]} {
    %c0 = arith.constant 0 : index
    %c0_0 = arith.constant 0 : index
    %0 = vector.load %arg1[%c0, %c0_0] : memref<8x128xbf16, #tpu.memory_space<vmem>>, vector<8x128xbf16>
    %c0_1 = arith.constant 0 : index
    %c0_2 = arith.constant 0 : index
    %1 = vector.load %arg2[%c0_1, %c0_2] : memref<128x128xbf16, #tpu.memory_space<vmem>>, vector<128x128xbf16>
    %cst = arith.constant dense<0.000000e+00> : vector<8x128xf32>
    %2 = tpu.matmul %0, %1, %cst {dimension_numbers = #tpu.dot_dimension_numbers<[1], [0], [0], [1], [0, 0, 1, 1], [], []>} : vector<8x128xbf16>, vector<128x128xbf16>, vector<8x128xf32> -> vector<8x128xf32>
    %c0_3 = arith.constant 0 : index
    %c0_4 = arith.constant 0 : index
    %3 = vector.load %arg3[%c0_3, %c0_4] : memref<1x128xf32, #tpu.memory_space<vmem>>, vector<1x128xf32>
    %4 = vector.broadcast %3 : vector<1x128xf32> to vector<8x128xf32>
    %5 = arith.addf %2, %4 : vector<8x128xf32>
    %cst_5 = arith.constant 0.000000e+00 : f32
    %6 = vector.broadcast %cst_5 : f32 to vector<8x128xf32>
    %7 = arith.maximumf %5, %6 : vector<8x128xf32>
    %8 = arith.truncf %7 : vector<8x128xf32> to vector<8x128xbf16>
    %c0_6 = arith.constant 0 : index
    %c0_7 = arith.constant 0 : index
    %9 = vector.load %arg4[%c0_6, %c0_7] : memref<128x256xbf16, #tpu.memory_space<vmem>>, vector<128x256xbf16>
    %cst_8 = arith.constant dense<0.000000e+00> : vector<8x256xf32>
    %10 = tpu.matmul %8, %9, %cst_8 {dimension_numbers = #tpu.dot_dimension_numbers<[1], [0], [0], [1], [0, 0, 1, 1], [], []>} : vector<8x128xbf16>, vector<128x256xbf16>, vector<8x256xf32> -> vector<8x256xf32>
    %c0_9 = arith.constant 0 : index
    %c0_10 = arith.constant 0 : index
    %11 = vector.load %arg5[%c0_9, %c0_10] : memref<1x256xf32, #tpu.memory_space<vmem>>, vector<1x256xf32>
    %12 = vector.broadcast %11 : vector<1x256xf32> to vector<8x256xf32>
    %13 = arith.addf %10, %12 : vector<8x256xf32>
    %c0_11 = arith.constant 0 : index
    %c0_12 = arith.constant 0 : index
    %14 = vector.load %arg6[%c0_11, %c0_12] : memref<1x256xf32, #tpu.memory_space<vmem>>, vector<1x256xf32>
    %15 = vector.broadcast %14 : vector<1x256xf32> to vector<8x256xf32>
    %16 = arith.mulf %13, %15 : vector<8x256xf32>
    %c0_13 = arith.constant 0 : index
    %c0_14 = arith.constant 0 : index
    %17 = vector.load %arg7[%c0_13, %c0_14] : memref<1x256xf32, #tpu.memory_space<vmem>>, vector<1x256xf32>
    %18 = vector.broadcast %17 : vector<1x256xf32> to vector<8x256xf32>
    %19 = arith.addf %16, %18 : vector<8x256xf32>
    %c0_15 = arith.constant 0 : index
    %c0_16 = arith.constant 0 : index
    %20 = vector.load %arg8[%c0_15, %c0_16] : memref<8x256xf32, #tpu.memory_space<vmem>>, vector<8x256xf32>
    tpu.vector_store %arg8[%c0_15, %c0_16], %19 {strides = array<i32>} : memref<8x256xf32, #tpu.memory_space<vmem>>, vector<8x256xf32>,
    return
  }
  func.func @transform_0(%arg0: i32) -> (i32, i32) {
    %c0_i32 = arith.constant 0 : i32
    %c0_i32_0 = arith.constant 0 : i32
    %c0_i32_1 = arith.constant 0 : i32
    return %c0_i32, %c0_i32_0 : i32, i32
  }
  func.func @transform_1(%arg0: i32) -> (i32, i32) {
    %c0_i32 = arith.constant 0 : i32
    %c0_i32_0 = arith.constant 0 : i32
    %c0_i32_1 = arith.constant 0 : i32
    return %c0_i32, %c0_i32_0 : i32, i32
  }
  func.func @transform_2(%arg0: i32) -> (i32, i32) {
    %c0_i32 = arith.constant 0 : i32
    %c0_i32_0 = arith.constant 0 : i32
    %c0_i32_1 = arith.constant 0 : i32
    return %c0_i32, %c0_i32_0 : i32, i32
  }
  func.func @transform_3(%arg0: i32) -> (i32, i32) {
    %c0_i32 = arith.constant 0 : i32
    %c0_i32_0 = arith.constant 0 : i32
    %c0_i32_1 = arith.constant 0 : i32
    return %c0_i32, %c0_i32_0 : i32, i32
  }
  func.func @transform_4(%arg0: i32) -> (i32, i32) {
    %c0_i32 = arith.constant 0 : i32
    %c0_i32_0 = arith.constant 0 : i32
    %c0_i32_1 = arith.constant 0 : i32
    return %c0_i32, %c0_i32_0 : i32, i32
  }
  func.func @transform_5(%arg0: i32) -> (i32, i32) {
    %c0_i32 = arith.constant 0 : i32
    %c0_i32_0 = arith.constant 0 : i32
    %c0_i32_1 = arith.constant 0 : i32
    return %c0_i32, %c0_i32_0 : i32, i32
  }
  func.func @transform_6(%arg0: i32) -> (i32, i32) {
    %c0_i32 = arith.constant 0 : i32
    %c0_i32_0 = arith.constant 0 : i32
    %c0_i32_1 = arith.constant 0 : i32
    return %c0_i32, %c0_i32_0 : i32, i32
  }
  func.func @transform_7(%arg0: i32) -> (i32, i32) {
    %c0_i32 = arith.constant 0 : i32
    %c0_i32_0 = arith.constant 0 : i32
    %c0_i32_1 = arith.constant 0 : i32
    return %c0_i32, %c0_i32_0 : i32, i32
  }
}

</mosaic_0001>

<llo_original>
// kernel: faster_rcnn_forward.3
$region0: #{faster_rcnn_forward.3}
  #allocation0 [shape = 'u32[]', space=smem, size = 0x4, offset = 0x4, fixed_abs, tag = 'smem constant byte address 0x4 - core index']
  #allocation1 [shape = 'u32[144,128]{1,0:T(1,128)}', space=vmem, size = 0x12000, scoped, tag = 'internal scratch']
  %s0 = inlined_call_operand.vmem [shape: bf16[512,36], index: 0, kind: input, shape index: {}]
  %s1 = inlined_call_operand.vmem [shape: bf16[36,128], index: 1, kind: input, shape index: {}]
  %s2 = inlined_call_operand.vmem [shape: f32[1,128], index: 2, kind: input, shape index: {}]
  %s3 = inlined_call_operand.vmem [shape: bf16[512,128], index: 3, kind: output, shape index: {}]
  %s4 = sld [smem:[#allocation0]]
  $region45: #{faster_rcnn_forward.3} parent=0
    _
  %s6 = ssub.s32 1, %s4
  %s7 = scalar_select 0, %s6, %s4
  loop: start=0, step=1, limit=4
  $region2: #{faster_rcnn_forward.3} parent=0 // loop_pre_header
    _
  $region3: #{faster_rcnn_forward.3} parent=0 // loop_header
    %s9 = sphi 0, %s13
    %p10 = scmp.ge.s32.totalorder %s9, 4
    %s16 = sphi 0, %s28
    %s17 = sphi 0, %s24
    %s18 = sphi 0, %s16
    %s19 = sphi 0, %s17
    %s20 = sphi 0, %s18
    %s21 = sphi 0, %s19
    %s31 = sphi 0, %s33
    %s34 = sphi 0, %s31
    %s35 = sphi 0, %s34
    %s51 = sphi 0, %s35
    %s57 = sphi 0, %s59
    %s60 = sphi 0, %s57
    %s61 = sphi 0, %s60
    %s77 = sphi 0, %s61
    %s83 = sphi 0, %s85
    %s86 = sphi 0, %s83
    %s87 = sphi 0, %s86
    %s103 = sphi 0, %s87
    %s111 = sphi 0, %s113
    %s114 = sphi 0, %s111
    %s115 = sphi 0, %s114
    %s131 = sphi 0, %s115
  $region4: #{faster_rcnn_forward.3} parent=0 // loop_header_branch
    %12 = sbr.rel (%p10) target = $region8
  $region5: #{faster_rcnn_forward.3} parent=0 // loop_body
    %s14 = ssub.s32 %s9, 1
    %s15 = ssub.s32 %s9, 2
    %s22 = sadd.s32 1, %s17
    %p23 = scmp.ge.s32.totalorder %s22, 1
    %s24 = scalar_select %p23, 0, %s22
    %s25 = sadd.s32 1, %s16
    %s26 = scalar_select %p23, %s25, %s16
    %p27 = scmp.ge.s32.totalorder %s26, 2
    %s28 = scalar_select %p27, 0, %s26
    %s29 = ssub.s32 %s16, %s28
    %p30 = scmp.eq.s32.totalorder %s29, 0
    %s32 = sadd.s32 %s31, 1
    %s33 = scalar_select %p30, %s31, %s32
    %p36 = pneg %p30
    %p37 = scmp.eq.s32.totalorder %s9, 1
    %p38 = por %p36, %p37
    %p39 = scmp.ne.s32.totalorder %s31, %s34
    %p40 = scmp.eq.s32.totalorder %s9, 0
    %p41 = por %p39, %p40
    %p42 = scmp.ne.s32.totalorder %s31, %s34
    %p43 = scmp.eq.s32.totalorder %s14, 1
    %p44 = por %p42, %p43
    %p45 = scmp.ne.s32.totalorder %s34, %s35
    %p46 = scmp.eq.s32.totalorder %s14, 0
    %p47 = por %p45, %p46
    %p48 = scmp.ne.s32.totalorder %s34, %s35
    %p49 = scmp.eq.s32.totalorder %s15, 1
    %p50 = por %p48, %p49
    %p52 = scmp.ne.s32.totalorder %s35, %s51
    %p53 = scmp.eq.s32.totalorder %s15, 0
    %p54 = por %p52, %p53
    %s55 = ssub.s32 %s17, %s24
    %p56 = scmp.eq.s32.totalorder %s55, 0
    %s58 = sadd.s32 %s57, 1
    %s59 = scalar_select %p56, %s57, %s58
    %p62 = pneg %p56
    %p63 = scmp.eq.s32.totalorder %s9, 1
    %p64 = por %p62, %p63
    %p65 = scmp.ne.s32.totalorder %s57, %s60
    %p66 = scmp.eq.s32.totalorder %s9, 0
    %p67 = por %p65, %p66
    %p68 = scmp.ne.s32.totalorder %s57, %s60
    %p69 = scmp.eq.s32.totalorder %s14, 1
    %p70 = por %p68, %p69
    %p71 = scmp.ne.s32.totalorder %s60, %s61
    %p72 = scmp.eq.s32.totalorder %s14, 0
    %p73 = por %p71, %p72
    %p74 = scmp.ne.s32.totalorder %s60, %s61
    %p75 = scmp.eq.s32.totalorder %s15, 1
    %p76 = por %p74, %p75
    %p78 = scmp.ne.s32.totalorder %s61, %s77
    %p79 = scmp.eq.s32.totalorder %s15, 0
    %p80 = por %p78, %p79
    %s81 = ssub.s32 %s17, %s24
    %p82 = scmp.eq.s32.totalorder %s81, 0
    %s84 = sadd.s32 %s83, 1
    %s85 = scalar_select %p82, %s83, %s84
    %p88 = pneg %p82
    %p89 = scmp.eq.s32.totalorder %s9, 1
    %p90 = por %p88, %p89
    %p91 = scmp.ne.s32.totalorder %s83, %s86
    %p92 = scmp.eq.s32.totalorder %s9, 0
    %p93 = por %p91, %p92
    %p94 = scmp.ne.s32.totalorder %s83, %s86
    %p95 = scmp.eq.s32.totalorder %s14, 1
    %p96 = por %p94, %p95
    %p97 = scmp.ne.s32.totalorder %s86, %s87
    %p98 = scmp.eq.s32.totalorder %s14, 0
    %p99 = por %p97, %p98
    %p100 = scmp.ne.s32.totalorder %s86, %s87
    %p101 = scmp.eq.s32.totalorder %s15, 1
    %p102 = por %p100, %p101
    %p104 = scmp.ne.s32.totalorder %s87, %s103
    %p105 = scmp.eq.s32.totalorder %s15, 0
    %p106 = por %p104, %p105
    %s107 = ssub.s32 %s16, %s28
    %s108 = ssub.s32 %s17, %s24
    %s109 = sor.u32 %s107, %s108
    %p110 = scmp.eq.s32.totalorder %s109, 0
    %s112 = sadd.s32 %s111, 1
    %s113 = scalar_select %p110, %s111, %s112
    %p116 = pneg %p110
    %p117 = scmp.eq.s32.totalorder %s9, 1
    %p118 = por %p116, %p117
    %p119 = scmp.ne.s32.totalorder %s111, %s114
    %p120 = scmp.eq.s32.totalorder %s9, 0
    %p121 = por %p119, %p120
    %p122 = scmp.ne.s32.totalorder %s111, %s114
    %p123 = scmp.eq.s32.totalorder %s14, 1
    %p124 = por %p122, %p123
    %p125 = scmp.ne.s32.totalorder %s114, %s115
    %p126 = scmp.eq.s32.totalorder %s14, 0
    %p127 = por %p125, %p126
    %p128 = scmp.ne.s32.totalorder %s114, %s115
    %p129 = scmp.eq.s32.totalorder %s15, 1
    %p130 = por %p128, %p129
    %p132 = scmp.ne.s32.totalorder %s115, %s131
    %p133 = scmp.eq.s32.totalorder %s15, 0
    %p134 = por %p132, %p133
    %p135 = scmp.le.s32.totalorder 1, %s9
    %p136 = scmp.lt.s32.totalorder %s9, 3
    %p137 = pnand %p135, %p136
    %p138 = pneg %p137
    // Predicated region
    $region9: #{faster_rcnn_forward.3} parent=5 // pred_check
      _
    $region10: #{faster_rcnn_forward.3} parent=5 // pred_check_branch
      %140 = sbr.rel (%p137) target = $region12
    $region11: #{faster_rcnn_forward.3} parent=5 // pred_region
      %s141 = ssub.s32 %s9, 1
      // Predicated region
      $region13: #{faster_rcnn_forward.3} parent=11 // pred_check
        %p142 = pneg %p73
      $region14: #{faster_rcnn_forward.3} parent=11 // pred_check_branch
        %144 = sbr.rel (%p142) target = $region16
      $region15: #{faster_rcnn_forward.3} parent=11 // pred_region
        %p145 = scmp.lt.s32.totalorder %s19, 0
        %s146 = scalar_select %p145, %s19, 0
        %s147 = smul.addr %s146, 4
        %s148 = scalar_lea.vmem %s1, %s147
      $region16: #{faster_rcnn_forward.3} parent=11 // pred_fallthru
        _
      // Predicated region
      $region17: #{faster_rcnn_forward.3} parent=11 // pred_check
        %p149 = pneg %p99
      $region18: #{faster_rcnn_forward.3} parent=11 // pred_check_branch
        %151 = sbr.rel (%p149) target = $region20
      $region19: #{faster_rcnn_forward.3} parent=11 // pred_region
        %p152 = scmp.lt.s32.totalorder %s19, 0
        %s153 = scalar_select %p152, %s19, 0
        %s154 = scalar_lea.vmem %s2, %s153
      $region20: #{faster_rcnn_forward.3} parent=11 // pred_fallthru
        _
    $region12: #{faster_rcnn_forward.3} parent=5 // pred_fallthru
      _
    %p155 = scmp.lt.s32.totalorder %s9, 2
    // Predicated region
    $region21: #{faster_rcnn_forward.3} parent=5 // pred_check
      %p156 = pneg %p155
    $region22: #{faster_rcnn_forward.3} parent=5 // pred_check_branch
      %158 = sbr.rel (%p156) target = $region24
    $region23: #{faster_rcnn_forward.3} parent=5 // pred_region
      // Predicated region
      $region25: #{faster_rcnn_forward.3} parent=23 // pred_check
        %p159 = pneg %p41
      $region26: #{faster_rcnn_forward.3} parent=23 // pred_check_branch
        %161 = sbr.rel (%p159) target = $region28
      $region27: #{faster_rcnn_forward.3} parent=23 // pred_region
        %s162 = smul.u32 32, %s16
        %p163 = scmp.lt.s32.totalorder %s162, 63
        %s164 = scalar_select %p163, %s162, 63
        %s165 = smul.addr %s164, 4
        %s166 = scalar_lea.vmem %s0, %s165
        %s167 = smul.u32 32, %s16
      $region28: #{faster_rcnn_forward.3} parent=23 // pred_fallthru
        _
    $region24: #{faster_rcnn_forward.3} parent=5 // pred_fallthru
      _
    %p168 = scmp.le.s32.totalorder 1, %s9
    %p169 = scmp.lt.s32.totalorder %s9, 3
    %p170 = pnand %p168, %p169
    %p171 = pneg %p170
    // Predicated region
    $region29: #{faster_rcnn_forward.3} parent=5 // pred_check
      _
    $region30: #{faster_rcnn_forward.3} parent=5 // pred_check_branch
      %173 = sbr.rel (%p170) target = $region32
    $region31: #{faster_rcnn_forward.3} parent=5 // pred_region
      %s174 = ssub.s32 %s9, 1
      %s175 = smul.u32 32, %s18
      %p176 = scmp.lt.s32.totalorder %s175, 63
      %s177 = scalar_select %p176, %s175, 63
      %s178 = smul.addr %s177, 4
      %s179 = scalar_lea.vmem %s0, %s178
      %p180 = pneg %p47
      %p181 = pneg %p44
      %p182 = scmp.lt.s32.totalorder %s19, 0
      %s183 = scalar_select %p182, %s19, 0
      %s184 = smul.addr %s183, 4
      %s185 = scalar_lea.vmem %s1, %s184
      %p186 = pneg %p73
      %p187 = pneg %p70
      %p188 = scmp.lt.s32.totalorder %s19, 0
      %s189 = scalar_select %p188, %s19, 0
      %s190 = scalar_lea.vmem %s2, %s189
      %p191 = pneg %p99
      %p192 = pneg %p96
      %p193 = pneg %p127
      %p194 = pneg %p124
      %s195 = smul.u32 32, %s18
      %p196 = scmp.lt.s32.totalorder %s195, 63
      %s197 = scalar_select %p196, %s195, 63
      %p198 = scmp.lt.s32.totalorder %s19, 0
      %s199 = scalar_select %p198, %s19, 0
      %s200 = sadd.s32 %s199, %s197
      %s201 = smul.addr %s200, 4
      %s202 = scalar_lea.vmem %s3, %s201
      %s203 = smul.u32 32, %s18
      %p204 = scmp.lt.s32.totalorder %s203, 63
      %s205 = scalar_select %p204, %s203, 63
      %s206 = smul.addr %s205, 4
      %s207 = scalar_lea.vmem %s0, %s206
      %s208 = smul.u32 32, %s18
      %p209 = scmp.lt.s32.totalorder %s19, 0
      %s210 = scalar_select %p209, %s19, 0
      %s211 = smul.addr %s210, 4
      %s212 = scalar_lea.vmem %s1, %s211
      %p213 = scmp.lt.s32.totalorder %s19, 0
      %s214 = scalar_select %p213, %s19, 0
      %s215 = scalar_lea.vmem %s2, %s214
      %s216 = smul.u32 32, %s18
      %p217 = scmp.lt.s32.totalorder %s216, 63
      %s218 = scalar_select %p217, %s216, 63
      %p219 = scmp.lt.s32.totalorder %s19, 0
      %s220 = scalar_select %p219, %s19, 0
      %s221 = sadd.s32 %s220, %s218
      %s222 = smul.addr %s221, 4
      %s223 = scalar_lea.vmem %s3, %s222
      %s224 = smul.u32 32, %s18
      %v226 = vld [vmem:[%s207] sm:$0xf]
      %v227 = vld [vmem:[%s207 + $0x4] sm:$0xf]
      %v228 = vld [vmem:[%s207 + $0x8] sm:$0xf]
      %v229 = vld [vmem:[%s207 + $0xc] sm:$0xf]
      %v230 = vld [vmem:[%s207 + $0x10] sm:$0xf]
      %v231 = vld [vmem:[%s207 + $0x14] sm:$0xf]
      %v232 = vld [vmem:[%s207 + $0x18] sm:$0xf]
      %v233 = vld [vmem:[%s207 + $0x1c] sm:$0xf]
      %v234 = vld [vmem:[%s207 + $0x20] sm:$0xf]
      %v235 = vld [vmem:[%s207 + $0x24] sm:$0xf]
      %v236 = vld [vmem:[%s207 + $0x28] sm:$0xf]
      %v237 = vld [vmem:[%s207 + $0x2c] sm:$0xf]
      %v238 = vld [vmem:[%s207 + $0x30] sm:$0xf]
      %v239 = vld [vmem:[%s207 + $0x34] sm:$0xf]
      %v240 = vld [vmem:[%s207 + $0x38] sm:$0xf]
      %v241 = vld [vmem:[%s207 + $0x3c] sm:$0xf]
      %v242 = vld [vmem:[%s207 + $0x40] sm:$0xf]
      %v243 = vld [vmem:[%s207 + $0x44] sm:$0xf]
      %v244 = vld [vmem:[%s207 + $0x48] sm:$0xf]
      %v245 = vld [vmem:[%s207 + $0x4c] sm:$0xf]
      %v246 = vld [vmem:[%s207 + $0x50] sm:$0xf]
      %v247 = vld [vmem:[%s207 + $0x54] sm:$0xf]
      %v248 = vld [vmem:[%s207 + $0x58] sm:$0xf]
      %v249 = vld [vmem:[%s207 + $0x5c] sm:$0xf]
      %v250 = vld [vmem:[%s207 + $0x60] sm:$0xf]
      %v251 = vld [vmem:[%s207 + $0x64] sm:$0xf]
      %v252 = vld [vmem:[%s207 + $0x68] sm:$0xf]
      %v253 = vld [vmem:[%s207 + $0x6c] sm:$0xf]
      %v254 = vld [vmem:[%s207 + $0x70] sm:$0xf]
      %v255 = vld [vmem:[%s207 + $0x74] sm:$0xf]
      %v256 = vld [vmem:[%s207 + $0x78] sm:$0xf]
      %v257 = vld [vmem:[%s207 + $0x7c] sm:$0xf]
      %v258 = vld [vmem:[%s212] sm:$0xf]
      %v259 = vld [vmem:[%s212 + $0x4] sm:$0xf]
      %v260 = vld [vmem:[%s212 + $0x8] sm:$0xf]
      %v261 = vld [vmem:[%s212 + $0xc] sm:$0xf]
      %v262 = vld [vmem:[%s212 + $0x10] sm:$0x3]
      %v263 = vld [vmem:[%s215] sm:$0x1]
      %v265 = vlaneseq
      %v266 = vshrl.u32 %v265, 7
      %v267 = vsub.s32 0, %v266
      %v268 = vrot.slane %v263, %v267
      %v302 = vunpack.c.l.b16 %v226
      %v303 = vunpack.c.l.b16 %v227
      %v304 = vunpack.c.l.b16 %v228
      %v305 = vunpack.c.l.b16 %v229
      %v306 = vunpack.c.l.b16 %v230
      %v307 = vunpack.c.l.b16 %v231
      %v308 = vunpack.c.l.b16 %v232
      %v309 = vunpack.c.l.b16 %v233
      %v310 = vunpack.c.l.b16 %v234
      %v311 = vunpack.c.l.b16 %v235
      %v312 = vunpack.c.l.b16 %v236
      %v313 = vunpack.c.l.b16 %v237
      %v314 = vunpack.c.l.b16 %v238
      %v315 = vunpack.c.l.b16 %v239
      %v316 = vunpack.c.l.b16 %v240
      %v317 = vunpack.c.l.b16 %v241
      %v318 = vunpack.c.l.b16 %v242
      %v319 = vunpack.c.l.b16 %v243
      %v320 = vunpack.c.l.b16 %v244
      %v321 = vunpack.c.l.b16 %v245
      %v322 = vunpack.c.l.b16 %v246
      %v323 = vunpack.c.l.b16 %v247
      %v324 = vunpack.c.l.b16 %v248
      %v325 = vunpack.c.l.b16 %v249
      %v326 = vunpack.c.l.b16 %v250
      %v327 = vunpack.c.l.b16 %v251
      %v328 = vunpack.c.l.b16 %v252
      %v329 = vunpack.c.l.b16 %v253
      %v330 = vunpack.c.l.b16 %v254
      %v331 = vunpack.c.l.b16 %v255
      %v332 = vunpack.c.l.b16 %v256
      %v333 = vunpack.c.l.b16 %v257
      %v334 = vpack.c.b16 %v303, %v302
      %v335 = vpack.c.b16 %v305, %v304
      %v336 = vpack.c.b16 %v307, %v306
      %v337 = vpack.c.b16 %v309, %v308
      %v338 = vpack.c.b16 %v311, %v310
      %v339 = vpack.c.b16 %v313, %v312
      %v340 = vpack.c.b16 %v315, %v314
      %v341 = vpack.c.b16 %v317, %v316
      %v342 = vpack.c.b16 %v319, %v318
      %v343 = vpack.c.b16 %v321, %v320
      %v344 = vpack.c.b16 %v323, %v322
      %v345 = vpack.c.b16 %v325, %v324
      %v346 = vpack.c.b16 %v327, %v326
      %v347 = vpack.c.b16 %v329, %v328
      %v348 = vpack.c.b16 %v331, %v330
      %v349 = vpack.c.b16 %v333, %v332
      %v355 = vunpack.c.l.b16 %v258
      %v356 = vunpack.c.l.b16 %v259
      %v357 = vunpack.c.l.b16 %v260
      %v358 = vunpack.c.l.b16 %v261
      %v359 = vunpack.c.l.b16 %v262
      %v360 = vpack.c.b16 %v356, %v355
      %v361 = vpack.c.b16 %v358, %v357
      %v362 = vpack.c.b16 %v359, %v359
      %vm365 = vcmask 293888
      %v367 = vsel %vm365, %v334, 0
      %v370 = vsel %vm365, %v335, 0
      %v373 = vsel %vm365, %v336, 0
      %v376 = vsel %vm365, %v337, 0
      %v379 = vsel %vm365, %v338, 0
      %v382 = vsel %vm365, %v339, 0
      %v385 = vsel %vm365, %v340, 0
      %v388 = vsel %vm365, %v341, 0
      %v391 = vsel %vm365, %v342, 0
      %v394 = vsel %vm365, %v343, 0
      %v397 = vsel %vm365, %v344, 0
      %v400 = vsel %vm365, %v345, 0
      %v403 = vsel %vm365, %v346, 0
      %v406 = vsel %vm365, %v347, 0
      %v409 = vsel %vm365, %v348, 0
      %v412 = vsel %vm365, %v349, 0
      %vm414 = vcmask 1041408
      %v416 = vsel %vm414, %v362, 0
      %418 = vmatprep.subr.bf16.mxu0 0
      %419 = vmatpush1.bf16.msra.mxu0 %v360
      %420 = vmatprep.subr.bf16.mxu0 0
      %421 = vmatpush1.bf16.msra.mxu0 %v361
      %422 = vmatprep.subr.bf16.mxu0 0
      %423 = vmatpush1.bf16.msra.mxu0 %v416
      %424 = vmatprep.subr.bf16.mxu0 0
      %425 = vmatpush1.bf16.msra.mxu0 0
      %426 = vmatprep.subr.bf16.mxu0 0
      %427 = vmatpush1.bf16.msra.mxu0 0
      %428 = vmatprep.subr.bf16.mxu0 0
      %429 = vmatpush1.bf16.msra.mxu0 0
      %430 = vmatprep.subr.bf16.mxu0 0
      %431 = vmatpush1.bf16.msra.mxu0 0
      %432 = vmatprep.subr.bf16.mxu0 0
      %433 = vmatpush1.bf16.msra.mxu0 0
      %434 = vmatprep.subr.bf16.mxu0 0
      %435 = vmatpush1.bf16.msra.mxu0 0
      %436 = vmatprep.subr.bf16.mxu0 0
      %437 = vmatpush1.bf16.msra.mxu0 0
      %438 = vmatprep.subr.bf16.mxu0 0
      %439 = vmatpush1.bf16.msra.mxu0 0
      %440 = vmatprep.subr.bf16.mxu0 0
      %441 = vmatpush1.bf16.msra.mxu0 0
      %442 = vmatprep.subr.bf16.mxu0 0
      %443 = vmatpush1.bf16.msra.mxu0 0
      %444 = vmatprep.subr.bf16.mxu0 0
      %445 = vmatpush1.bf16.msra.mxu0 0
      %446 = vmatprep.subr.bf16.mxu0 0
      %447 = vmatpush1.bf16.msra.mxu0 0
      %448 = vmatprep.subr.bf16.mxu0 0
      %449 = vmatpush1.bf16.msra.mxu0 0
      %450 = vmatprep.mubr.bf16.mxu0 0
      %451 = vmatmul.mubr.bf16.gmra.mrb[0].mxu0 %v367
      %v452 = vpop.f32.mrb[0].mxu0
      %v453 = vadd.f32 %v268, %v452
      %v454 = vpop.f32.mrb[0].mxu0
      %v455 = vpop.f32.mrb[0].mxu0
      %v456 = vadd.f32 %v268, %v455
      %v457 = vpop.f32.mrb[0].mxu0
      %458 = vmatprep.mubr.bf16.mxu0 0
      %459 = vmatmul.mubr.bf16.gmra.mrb[0].mxu0 %v370
      %v460 = vpop.f32.mrb[0].mxu0
      %v461 = vadd.f32 %v268, %v460
      %v462 = vpop.f32.mrb[0].mxu0
      %v463 = vpop.f32.mrb[0].mxu0
      %v464 = vadd.f32 %v268, %v463
      %v465 = vpop.f32.mrb[0].mxu0
      %466 = vmatprep.mubr.bf16.mxu0 0
      %467 = vmatmul.mubr.bf16.gmra.mrb[0].mxu0 %v373
      %v468 = vpop.f32.mrb[0].mxu0
      %v469 = vadd.f32 %v268, %v468
      %v470 = vpop.f32.mrb[0].mxu0
      %v471 = vpop.f32.mrb[0].mxu0
      %v472 = vadd.f32 %v268, %v471
      %v473 = vpop.f32.mrb[0].mxu0
      %474 = vmatprep.mubr.bf16.mxu0 0
      %475 = vmatmul.mubr.bf16.gmra.mrb[0].mxu0 %v376
      %v476 = vpop.f32.mrb[0].mxu0
      %v477 = vadd.f32 %v268, %v476
      %v478 = vpop.f32.mrb[0].mxu0
      %v479 = vpop.f32.mrb[0].mxu0
      %v480 = vadd.f32 %v268, %v479
      %v481 = vpop.f32.mrb[0].mxu0
      %482 = vmatprep.mubr.bf16.mxu0 0
      %483 = vmatmul.mubr.bf16.gmra.mrb[0].mxu0 %v379
      %v484 = vpop.f32.mrb[0].mxu0
      %v485 = vadd.f32 %v268, %v484
      %v486 = vpop.f32.mrb[0].mxu0
      %v487 = vpop.f32.mrb[0].mxu0
      %v488 = vadd.f32 %v268, %v487
      %v489 = vpop.f32.mrb[0].mxu0
      %490 = vmatprep.mubr.bf16.mxu0 0
      %491 = vmatmul.mubr.bf16.gmra.mrb[0].mxu0 %v382
      %v492 = vpop.f32.mrb[0].mxu0
      %v493 = vadd.f32 %v268, %v492
      %v494 = vpop.f32.mrb[0].mxu0
      %v495 = vpop.f32.mrb[0].mxu0
      %v496 = vadd.f32 %v268, %v495
      %v497 = vpop.f32.mrb[0].mxu0
      %498 = vmatprep.mubr.bf16.mxu0 0
      %499 = vmatmul.mubr.bf16.gmra.mrb[0].mxu0 %v385
      %v500 = vpop.f32.mrb[0].mxu0
      %v501 = vadd.f32 %v268, %v500
      %v502 = vpop.f32.mrb[0].mxu0
      %v503 = vpop.f32.mrb[0].mxu0
      %v504 = vadd.f32 %v268, %v503
      %v505 = vpop.f32.mrb[0].mxu0
      %506 = vmatprep.mubr.bf16.mxu0 0
      %507 = vmatmul.mubr.bf16.gmra.mrb[0].mxu0 %v388
      %v508 = vpop.f32.mrb[0].mxu0
      %v509 = vadd.f32 %v268, %v508
      %v510 = vpop.f32.mrb[0].mxu0
      %v511 = vpop.f32.mrb[0].mxu0
      %v512 = vadd.f32 %v268, %v511
      %v513 = vpop.f32.mrb[0].mxu0
      %514 = vmatprep.mubr.bf16.mxu0 0
      %515 = vmatmul.mubr.bf16.gmra.mrb[0].mxu0 %v391
      %v516 = vpop.f32.mrb[0].mxu0
      %v517 = vadd.f32 %v268, %v516
      %v518 = vpop.f32.mrb[0].mxu0
      %v519 = vpop.f32.mrb[0].mxu0
      %v520 = vadd.f32 %v268, %v519
      %v521 = vpop.f32.mrb[0].mxu0
      %522 = vmatprep.mubr.bf16.mxu0 0
      %523 = vmatmul.mubr.bf16.gmra.mrb[0].mxu0 %v394
      %v524 = vpop.f32.mrb[0].mxu0
      %v525 = vadd.f32 %v268, %v524
      %v526 = vpop.f32.mrb[0].mxu0
      %v527 = vpop.f32.mrb[0].mxu0
      %v528 = vadd.f32 %v268, %v527
      %v529 = vpop.f32.mrb[0].mxu0
      %530 = vmatprep.mubr.bf16.mxu0 0
      %531 = vmatmul.mubr.bf16.gmra.mrb[0].mxu0 %v397
      %v532 = vpop.f32.mrb[0].mxu0
      %v533 = vadd.f32 %v268, %v532
      %v534 = vpop.f32.mrb[0].mxu0
      %v535 = vpop.f32.mrb[0].mxu0
      %v536 = vadd.f32 %v268, %v535
      %v537 = vpop.f32.mrb[0].mxu0
      %538 = vmatprep.mubr.bf16.mxu0 0
      %539 = vmatmul.mubr.bf16.gmra.mrb[0].mxu0 %v400
      %v540 = vpop.f32.mrb[0].mxu0
      %v541 = vadd.f32 %v268, %v540
      %v542 = vpop.f32.mrb[0].mxu0
      %v543 = vpop.f32.mrb[0].mxu0
      %v544 = vadd.f32 %v268, %v543
      %v545 = vpop.f32.mrb[0].mxu0
      %546 = vmatprep.mubr.bf16.mxu0 0
      %547 = vmatmul.mubr.bf16.gmra.mrb[0].mxu0 %v403
      %v548 = vpop.f32.mrb[0].mxu0
      %v549 = vadd.f32 %v268, %v548
      %v550 = vpop.f32.mrb[0].mxu0
      %v551 = vpop.f32.mrb[0].mxu0
      %v552 = vadd.f32 %v268, %v551
      %v553 = vpop.f32.mrb[0].mxu0
      %554 = vmatprep.mubr.bf16.mxu0 0
      %555 = vmatmul.mubr.bf16.gmra.mrb[0].mxu0 %v406
      %v556 = vpop.f32.mrb[0].mxu0
      %v557 = vadd.f32 %v268, %v556
      %v558 = vpop.f32.mrb[0].mxu0
      %v559 = vpop.f32.mrb[0].mxu0
      %v560 = vadd.f32 %v268, %v559
      %v561 = vpop.f32.mrb[0].mxu0
      %562 = vmatprep.mubr.bf16.mxu0 0
      %563 = vmatmul.mubr.bf16.gmra.mrb[0].mxu0 %v409
      %v564 = vpop.f32.mrb[0].mxu0
      %v565 = vadd.f32 %v268, %v564
      %v566 = vpop.f32.mrb[0].mxu0
      %v567 = vpop.f32.mrb[0].mxu0
      %v568 = vadd.f32 %v268, %v567
      %v569 = vpop.f32.mrb[0].mxu0
      %570 = vmatprep.mubr.bf16.mxu0 0
      %571 = vmatmul.mubr.bf16.gmra.mrb[0].mxu0 %v412
      %v572 = vpop.f32.mrb[0].mxu0
      %v573 = vadd.f32 %v268, %v572
      %v574 = vpop.f32.mrb[0].mxu0
      %v575 = vpop.f32.mrb[0].mxu0
      %v576 = vadd.f32 %v268, %v575
      %v577 = vpop.f32.mrb[0].mxu0
      %578 = vdwg.mxu0
      %v579 = vmax.f32 %v453, 0.0
      %v580 = vmax.f32 %v456, 0.0
      %v581 = vmax.f32 %v461, 0.0
      %v582 = vmax.f32 %v464, 0.0
      %v583 = vmax.f32 %v469, 0.0
      %v584 = vmax.f32 %v472, 0.0
      %v585 = vmax.f32 %v477, 0.0
      %v586 = vmax.f32 %v480, 0.0
      %v587 = vmax.f32 %v485, 0.0
      %v588 = vmax.f32 %v488, 0.0
      %v589 = vmax.f32 %v493, 0.0
      %v590 = vmax.f32 %v496, 0.0
      %v591 = vmax.f32 %v501, 0.0
      %v592 = vmax.f32 %v504, 0.0
      %v593 = vmax.f32 %v509, 0.0
      %v594 = vmax.f32 %v512, 0.0
      %v595 = vmax.f32 %v517, 0.0
      %v596 = vmax.f32 %v520, 0.0
      %v597 = vmax.f32 %v525, 0.0
      %v598 = vmax.f32 %v528, 0.0
      %v599 = vmax.f32 %v533, 0.0
      %v600 = vmax.f32 %v536, 0.0
      %v601 = vmax.f32 %v541, 0.0
      %v602 = vmax.f32 %v544, 0.0
      %v603 = vmax.f32 %v549, 0.0
      %v604 = vmax.f32 %v552, 0.0
      %v605 = vmax.f32 %v557, 0.0
      %v606 = vmax.f32 %v560, 0.0
      %v607 = vmax.f32 %v565, 0.0
      %v608 = vmax.f32 %v568, 0.0
      %v609 = vmax.f32 %v573, 0.0
      %v610 = vmax.f32 %v576, 0.0
      %v611 = vpack.c.bf16 %v580, %v579
      %v612 = vpack.c.bf16 %v582, %v581
      %v613 = vpack.c.bf16 %v584, %v583
      %v614 = vpack.c.bf16 %v586, %v585
      %v615 = vpack.c.bf16 %v588, %v587
      %v616 = vpack.c.bf16 %v590, %v589
      %v617 = vpack.c.bf16 %v592, %v591
      %v618 = vpack.c.bf16 %v594, %v593
      %v619 = vpack.c.bf16 %v596, %v595
      %v620 = vpack.c.bf16 %v598, %v597
      %v621 = vpack.c.bf16 %v600, %v599
      %v622 = vpack.c.bf16 %v602, %v601
      %v623 = vpack.c.bf16 %v604, %v603
      %v624 = vpack.c.bf16 %v606, %v605
      %v625 = vpack.c.bf16 %v608, %v607
      %v626 = vpack.c.bf16 %v610, %v609
      %v643 = vunpack.c.l.b16 %v611
      %v644 = vunpack.c.h.b16 %v611
      %v645 = vunpack.c.l.b16 %v612
      %v646 = vunpack.c.h.b16 %v612
      %v647 = vunpack.c.l.b16 %v613
      %v648 = vunpack.c.h.b16 %v613
      %v649 = vunpack.c.l.b16 %v614
      %v650 = vunpack.c.h.b16 %v614
      %v651 = vunpack.c.l.b16 %v615
      %v652 = vunpack.c.h.b16 %v615
      %v653 = vunpack.c.l.b16 %v616
      %v654 = vunpack.c.h.b16 %v616
      %v655 = vunpack.c.l.b16 %v617
      %v656 = vunpack.c.h.b16 %v617
      %v657 = vunpack.c.l.b16 %v618
      %v658 = vunpack.c.h.b16 %v618
      %v659 = vunpack.c.l.b16 %v619
      %v660 = vunpack.c.h.b16 %v619
      %v661 = vunpack.c.l.b16 %v620
      %v662 = vunpack.c.h.b16 %v620
      %v663 = vunpack.c.l.b16 %v621
      %v664 = vunpack.c.h.b16 %v621
      %v665 = vunpack.c.l.b16 %v622
      %v666 = vunpack.c.h.b16 %v622
      %v667 = vunpack.c.l.b16 %v623
      %v668 = vunpack.c.h.b16 %v623
      %v669 = vunpack.c.l.b16 %v624
      %v670 = vunpack.c.h.b16 %v624
      %v671 = vunpack.c.l.b16 %v625
      %v672 = vunpack.c.h.b16 %v625
      %v673 = vunpack.c.l.b16 %v626
      %v674 = vunpack.c.h.b16 %v626
      %v675 = vpack.c.b16 %v643, %v643
      %v676 = vpack.c.b16 %v644, %v644
      %v677 = vpack.c.b16 %v645, %v645
      %v678 = vpack.c.b16 %v646, %v646
      %v679 = vpack.c.b16 %v647, %v647
      %v680 = vpack.c.b16 %v648, %v648
      %v681 = vpack.c.b16 %v649, %v649
      %v682 = vpack.c.b16 %v650, %v650
      %v683 = vpack.c.b16 %v651, %v651
      %v684 = vpack.c.b16 %v652, %v652
      %v685 = vpack.c.b16 %v653, %v653
      %v686 = vpack.c.b16 %v654, %v654
      %v687 = vpack.c.b16 %v655, %v655
      %v688 = vpack.c.b16 %v656, %v656
      %v689 = vpack.c.b16 %v657, %v657
      %v690 = vpack.c.b16 %v658, %v658
      %v691 = vpack.c.b16 %v659, %v659
      %v692 = vpack.c.b16 %v660, %v660
      %v693 = vpack.c.b16 %v661, %v661
      %v694 = vpack.c.b16 %v662, %v662
      %v695 = vpack.c.b16 %v663, %v663
      %v696 = vpack.c.b16 %v664, %v664
      %v697 = vpack.c.b16 %v665, %v665
      %v698 = vpack.c.b16 %v666, %v666
      %v699 = vpack.c.b16 %v667, %v667
      %v700 = vpack.c.b16 %v668, %v668
      %v701 = vpack.c.b16 %v669, %v669
      %v702 = vpack.c.b16 %v670, %v670
      %v703 = vpack.c.b16 %v671, %v671
      %v704 = vpack.c.b16 %v672, %v672
      %v705 = vpack.c.b16 %v673, %v673
      %v706 = vpack.c.b16 %v674, %v674
      %739 = vst [vmem:[%s223] sm:$0xf] %v675
      %740 = vst [vmem:[%s223 + $0x4] sm:$0xf] %v676
      %741 = vst [vmem:[%s223 + $0x8] sm:$0xf] %v677
      %742 = vst [vmem:[%s223 + $0xc] sm:$0xf] %v678
      %743 = vst [vmem:[%s223 + $0x10] sm:$0xf] %v679
      %744 = vst [vmem:[%s223 + $0x14] sm:$0xf] %v680
      %745 = vst [vmem:[%s223 + $0x18] sm:$0xf] %v681
      %746 = vst [vmem:[%s223 + $0x1c] sm:$0xf] %v682
      %747 = vst [vmem:[%s223 + $0x20] sm:$0xf] %v683
      %748 = vst [vmem:[%s223 + $0x24] sm:$0xf] %v684
      %749 = vst [vmem:[%s223 + $0x28] sm:$0xf] %v685
      %750 = vst [vmem:[%s223 + $0x2c] sm:$0xf] %v686
      %751 = vst [vmem:[%s223 + $0x30] sm:$0xf] %v687
      %752 = vst [vmem:[%s223 + $0x34] sm:$0xf] %v688
      %753 = vst [vmem:[%s223 + $0x38] sm:$0xf] %v689
      %754 = vst [vmem:[%s223 + $0x3c] sm:$0xf] %v690
      %755 = vst [vmem:[%s223 + $0x40] sm:$0xf] %v691
      %756 = vst [vmem:[%s223 + $0x44] sm:$0xf] %v692
      %757 = vst [vmem:[%s223 + $0x48] sm:$0xf] %v693
      %758 = vst [vmem:[%s223 + $0x4c] sm:$0xf] %v694
      %759 = vst [vmem:[%s223 + $0x50] sm:$0xf] %v695
      %760 = vst [vmem:[%s223 + $0x54] sm:$0xf] %v696
      %761 = vst [vmem:[%s223 + $0x58] sm:$0xf] %v697
      %762 = vst [vmem:[%s223 + $0x5c] sm:$0xf] %v698
      %763 = vst [vmem:[%s223 + $0x60] sm:$0xf] %v699
      %764 = vst [vmem:[%s223 + $0x64] sm:$0xf] %v700
      %765 = vst [vmem:[%s223 + $0x68] sm:$0xf] %v701
      %766 = vst [vmem:[%s223 + $0x6c] sm:$0xf] %v702
      %767 = vst [vmem:[%s223 + $0x70] sm:$0xf] %v703
      %768 = vst [vmem:[%s223 + $0x74] sm:$0xf] %v704
      %769 = vst [vmem:[%s223 + $0x78] sm:$0xf] %v705
      %770 = vst [vmem:[%s223 + $0x7c] sm:$0xf] %v706
      %s771 = smul.u32 32, %s18
      %p772 = scmp.lt.s32.totalorder %s771, 63
      %s773 = scalar_select %p772, %s771, 63
      %p774 = scmp.lt.s32.totalorder %s19, 0
      %s775 = scalar_select %p774, %s19, 0
      %s776 = sadd.s32 %s775, %s773
      %s777 = smul.addr %s776, 4
      %s778 = scalar_lea.vmem %s3, %s777
      // Predicated region
      $region33: #{faster_rcnn_forward.3} parent=31 // pred_check
        %p779 = pneg %p124
      $region34: #{faster_rcnn_forward.3} parent=31 // pred_check_branch
        %781 = sbr.rel (%p779) target = $region36
      $region35: #{faster_rcnn_forward.3} parent=31 // pred_region
        %s782 = smul.u32 32, %s18
      $region36: #{faster_rcnn_forward.3} parent=31 // pred_fallthru
        _
    $region32: #{faster_rcnn_forward.3} parent=5 // pred_fallthru
      _
    %p783 = scmp.le.s32.totalorder 2, %s9
    // Predicated region
    $region37: #{faster_rcnn_forward.3} parent=5 // pred_check
      %p784 = pneg %p783
    $region38: #{faster_rcnn_forward.3} parent=5 // pred_check_branch
      %786 = sbr.rel (%p784) target = $region40
    $region39: #{faster_rcnn_forward.3} parent=5 // pred_region
      %s787 = ssub.s32 %s9, 2
      // Predicated region
      $region41: #{faster_rcnn_forward.3} parent=39 // pred_check
        %p788 = pneg %p130
      $region42: #{faster_rcnn_forward.3} parent=39 // pred_check_branch
        %790 = sbr.rel (%p788) target = $region44
      $region43: #{faster_rcnn_forward.3} parent=39 // pred_region
        %s791 = smul.u32 32, %s20
        %p792 = scmp.lt.s32.totalorder %s791, 63
        %s793 = scalar_select %p792, %s791, 63
        %p794 = scmp.lt.s32.totalorder %s21, 0
        %s795 = scalar_select %p794, %s21, 0
        %s796 = sadd.s32 %s795, %s793
        %s797 = smul.addr %s796, 4
        %s798 = scalar_lea.vmem %s3, %s797
      $region44: #{faster_rcnn_forward.3} parent=39 // pred_fallthru
        _
    $region40: #{faster_rcnn_forward.3} parent=5 // pred_fallthru
      _
  $region6: #{faster_rcnn_forward.3} parent=0 // loop_footer
    %s13 = sadd.s32 1, %s9
  $region7: #{faster_rcnn_forward.3} parent=0 // loop_footer_branch
    %8 = sbr.rel target = $region3
  $region8: #{faster_rcnn_forward.3} parent=0 // loop_exit
    _

// kernel: faster_rcnn_forward.4
$region0: #{faster_rcnn_forward.4}
  #allocation0 [shape = 'u32[]', space=smem, size = 0x4, offset = 0x4, fixed_abs, tag = 'smem constant byte address 0x4 - core index']
  #allocation1 [shape = 'u32[144,128]{1,0:T(1,128)}', space=vmem, size = 0x12000, scoped, tag = 'internal scratch']
  %s0 = inlined_call_operand.vmem [shape: bf16[512,288], index: 0, kind: input, shape index: {}]
  %s1 = inlined_call_operand.vmem [shape: bf16[288,128], index: 1, kind: input, shape index: {}]
  %s2 = inlined_call_operand.vmem [shape: f32[1,128], index: 2, kind: input, shape index: {}]
  %s3 = inlined_call_operand.vmem [shape: bf16[128,128], index: 3, kind: input, shape index: {}]
  %s4 = inlined_call_operand.vmem [shape: f32[1,128], index: 4, kind: input, shape index: {}]
  %s5 = inlined_call_operand.vmem [shape: f32[512,128], index: 5, kind: output, shape index: {}]
  %s6 = sld [smem:[#allocation0]]
  $region53: #{faster_rcnn_forward.4} parent=0
    _
  %s8 = ssub.s32 1, %s6
  %s9 = scalar_select 0, %s8, %s6
  loop: start=0, step=1, limit=4
  $region2: #{faster_rcnn_forward.4} parent=0 // loop_pre_header
    _
  $region3: #{faster_rcnn_forward.4} parent=0 // loop_header
    %s11 = sphi 0, %s15
    %p12 = scmp.ge.s32.totalorder %s11, 4
    %s21 = sphi 0, %s23
    %s24 = sphi 0, %s21
    %s25 = sphi 0, %s24
    %s41 = sphi 0, %s25
    %s45 = sphi 0, %s45
    %s47 = sphi 0, %s45
    %s48 = sphi 0, %s47
    %s62 = sphi 0, %s48
    %s66 = sphi 0, %s66
    %s68 = sphi 0, %s66
    %s69 = sphi 0, %s68
    %s83 = sphi 0, %s69
    %s87 = sphi 0, %s87
    %s89 = sphi 0, %s87
    %s90 = sphi 0, %s89
    %s104 = sphi 0, %s90
    %s108 = sphi 0, %s108
    %s110 = sphi 0, %s108
    %s111 = sphi 0, %s110
    %s125 = sphi 0, %s111
    %s131 = sphi 0, %s133
    %s134 = sphi 0, %s131
    %s135 = sphi 0, %s134
    %s151 = sphi 0, %s135
  $region4: #{faster_rcnn_forward.4} parent=0 // loop_header_branch
    %14 = sbr.rel (%p12) target = $region8
  $region5: #{faster_rcnn_forward.4} parent=0 // loop_body
    %s16 = ssub.s32 %s11, 1
    %s17 = ssub.s32 %s11, 2
    %s18 = sadd.s32 %s11, 1
    %s19 = ssub.s32 %s11, %s18
    %p20 = scmp.eq.s32.totalorder %s19, 0
    %s22 = sadd.s32 %s21, 1
    %s23 = scalar_select %p20, %s21, %s22
    %p26 = pneg %p20
    %p27 = scmp.eq.s32.totalorder %s11, 1
    %p28 = por %p26, %p27
    %p29 = scmp.ne.s32.totalorder %s21, %s24
    %p30 = scmp.eq.s32.totalorder %s11, 0
    %p31 = por %p29, %p30
    %p32 = scmp.ne.s32.totalorder %s21, %s24
    %p33 = scmp.eq.s32.totalorder %s16, 1
    %p34 = por %p32, %p33
    %p35 = scmp.ne.s32.totalorder %s24, %s25
    %p36 = scmp.eq.s32.totalorder %s16, 0
    %p37 = por %p35, %p36
    %p38 = scmp.ne.s32.totalorder %s24, %s25
    %p39 = scmp.eq.s32.totalorder %s17, 1
    %p40 = por %p38, %p39
    %p42 = scmp.ne.s32.totalorder %s25, %s41
    %p43 = scmp.eq.s32.totalorder %s17, 0
    %p44 = por %p42, %p43
    %s46 = sadd.s32 %s45, 1
    %p49 = scmp.eq.s32.totalorder %s11, 1
    %p50 = scmp.ne.s32.totalorder %s45, %s47
    %p51 = scmp.eq.s32.totalorder %s11, 0
    %p52 = por %p50, %p51
    %p53 = scmp.ne.s32.totalorder %s45, %s47
    %p54 = scmp.eq.s32.totalorder %s16, 1
    %p55 = por %p53, %p54
    %p56 = scmp.ne.s32.totalorder %s47, %s48
    %p57 = scmp.eq.s32.totalorder %s16, 0
    %p58 = por %p56, %p57
    %p59 = scmp.ne.s32.totalorder %s47, %s48
    %p60 = scmp.eq.s32.totalorder %s17, 1
    %p61 = por %p59, %p60
    %p63 = scmp.ne.s32.totalorder %s48, %s62
    %p64 = scmp.eq.s32.totalorder %s17, 0
    %p65 = por %p63, %p64
    %s67 = sadd.s32 %s66, 1
    %p70 = scmp.eq.s32.totalorder %s11, 1
    %p71 = scmp.ne.s32.totalorder %s66, %s68
    %p72 = scmp.eq.s32.totalorder %s11, 0
    %p73 = por %p71, %p72
    %p74 = scmp.ne.s32.totalorder %s66, %s68
    %p75 = scmp.eq.s32.totalorder %s16, 1
    %p76 = por %p74, %p75
    %p77 = scmp.ne.s32.totalorder %s68, %s69
    %p78 = scmp.eq.s32.totalorder %s16, 0
    %p79 = por %p77, %p78
    %p80 = scmp.ne.s32.totalorder %s68, %s69
    %p81 = scmp.eq.s32.totalorder %s17, 1
    %p82 = por %p80, %p81
    %p84 = scmp.ne.s32.totalorder %s69, %s83
    %p85 = scmp.eq.s32.totalorder %s17, 0
    %p86 = por %p84, %p85
    %s88 = sadd.s32 %s87, 1
    %p91 = scmp.eq.s32.totalorder %s11, 1
    %p92 = scmp.ne.s32.totalorder %s87, %s89
    %p93 = scmp.eq.s32.totalorder %s11, 0
    %p94 = por %p92, %p93
    %p95 = scmp.ne.s32.totalorder %s87, %s89
    %p96 = scmp.eq.s32.totalorder %s16, 1
    %p97 = por %p95, %p96
    %p98 = scmp.ne.s32.totalorder %s89, %s90
    %p99 = scmp.eq.s32.totalorder %s16, 0
    %p100 = por %p98, %p99
    %p101 = scmp.ne.s32.totalorder %s89, %s90
    %p102 = scmp.eq.s32.totalorder %s17, 1
    %p103 = por %p101, %p102
    %p105 = scmp.ne.s32.totalorder %s90, %s104
    %p106 = scmp.eq.s32.totalorder %s17, 0
    %p107 = por %p105, %p106
    %s109 = sadd.s32 %s108, 1
    %p112 = scmp.eq.s32.totalorder %s11, 1
    %p113 = scmp.ne.s32.totalorder %s108, %s110
    %p114 = scmp.eq.s32.totalorder %s11, 0
    %p115 = por %p113, %p114
    %p116 = scmp.ne.s32.totalorder %s108, %s110
    %p117 = scmp.eq.s32.totalorder %s16, 1
    %p118 = por %p116, %p117
    %p119 = scmp.ne.s32.totalorder %s110, %s111
    %p120 = scmp.eq.s32.totalorder %s16, 0
    %p121 = por %p119, %p120
    %p122 = scmp.ne.s32.totalorder %s110, %s111
    %p123 = scmp.eq.s32.totalorder %s17, 1
    %p124 = por %p122, %p123
    %p126 = scmp.ne.s32.totalorder %s111, %s125
    %p127 = scmp.eq.s32.totalorder %s17, 0
    %p128 = por %p126, %p127
    %s129 = ssub.s32 %s11, %s18
    %p130 = scmp.eq.s32.totalorder %s129, 0
    %s132 = sadd.s32 %s131, 1
    %s133 = scalar_select %p130, %s131, %s132
    %p136 = pneg %p130
    %p137 = scmp.eq.s32.totalorder %s11, 1
    %p138 = por %p136, %p137
    %p139 = scmp.ne.s32.totalorder %s131, %s134
    %p140 = scmp.eq.s32.totalorder %s11, 0
    %p141 = por %p139, %p140
    %p142 = scmp.ne.s32.totalorder %s131, %s134
    %p143 = scmp.eq.s32.totalorder %s16, 1
    %p144 = por %p142, %p143
    %p145 = scmp.ne.s32.totalorder %s134, %s135
    %p146 = scmp.eq.s32.totalorder %s16, 0
    %p147 = por %p145, %p146
    %p148 = scmp.ne.s32.totalorder %s134, %s135
    %p149 = scmp.eq.s32.totalorder %s17, 1
    %p150 = por %p148, %p149
    %p152 = scmp.ne.s32.totalorder %s135, %s151
    %p153 = scmp.eq.s32.totalorder %s17, 0
    %p154 = por %p152, %p153
    %p155 = scmp.le.s32.totalorder 1, %s11
    %p156 = scmp.lt.s32.totalorder %s11, 3
    %p157 = pnand %p155, %p156
    %p158 = pneg %p157
    // Predicated region
    $region9: #{faster_rcnn_forward.4} parent=5 // pred_check
      _
    $region10: #{faster_rcnn_forward.4} parent=5 // pred_check_branch
      %160 = sbr.rel (%p157) target = $region12
    $region11: #{faster_rcnn_forward.4} parent=5 // pred_region
      %s161 = ssub.s32 %s11, 1
      // Predicated region
      $region13: #{faster_rcnn_forward.4} parent=11 // pred_check
        %p162 = pneg %p58
      $region14: #{faster_rcnn_forward.4} parent=11 // pred_check_branch
        %164 = sbr.rel (%p162) target = $region16
      $region15: #{faster_rcnn_forward.4} parent=11 // pred_region
        _
      $region16: #{faster_rcnn_forward.4} parent=11 // pred_fallthru
        _
      // Predicated region
      $region17: #{faster_rcnn_forward.4} parent=11 // pred_check
        %p165 = pneg %p79
      $region18: #{faster_rcnn_forward.4} parent=11 // pred_check_branch
        %167 = sbr.rel (%p165) target = $region20
      $region19: #{faster_rcnn_forward.4} parent=11 // pred_region
        _
      $region20: #{faster_rcnn_forward.4} parent=11 // pred_fallthru
        _
      // Predicated region
      $region21: #{faster_rcnn_forward.4} parent=11 // pred_check
        %p168 = pneg %p100
      $region22: #{faster_rcnn_forward.4} parent=11 // pred_check_branch
        %170 = sbr.rel (%p168) target = $region24
      $region23: #{faster_rcnn_forward.4} parent=11 // pred_region
        _
      $region24: #{faster_rcnn_forward.4} parent=11 // pred_fallthru
        _
      // Predicated region
      $region25: #{faster_rcnn_forward.4} parent=11 // pred_check
        %p171 = pneg %p121
      $region26: #{faster_rcnn_forward.4} parent=11 // pred_check_branch
        %173 = sbr.rel (%p171) target = $region28
      $region27: #{faster_rcnn_forward.4} parent=11 // pred_region
        _
      $region28: #{faster_rcnn_forward.4} parent=11 // pred_fallthru
        _
    $region12: #{faster_rcnn_forward.4} parent=5 // pred_fallthru
      _
    %p174 = scmp.lt.s32.totalorder %s11, 2
    // Predicated region
    $region29: #{faster_rcnn_forward.4} parent=5 // pred_check
      %p175 = pneg %p174
    $region30: #{faster_rcnn_forward.4} parent=5 // pred_check_branch
      %177 = sbr.rel (%p175) target = $region32
    $region31: #{faster_rcnn_forward.4} parent=5 // pred_region
      // Predicated region
      $region33: #{faster_rcnn_forward.4} parent=31 // pred_check
        %p178 = pneg %p31
      $region34: #{faster_rcnn_forward.4} parent=31 // pred_check_branch
        %180 = sbr.rel (%p178) target = $region36
      $region35: #{faster_rcnn_forward.4} parent=31 // pred_region
        %s181 = smul.u32 32, %s11
        %p182 = scmp.lt.s32.totalorder %s181, 63
        %s183 = scalar_select %p182, %s181, 63
        %s184 = smul.addr %s183, 3
        %s185 = smul.addr %s184, 4
        %s186 = scalar_lea.vmem %s0, %s185
        %s187 = smul.u32 32, %s11
      $region36: #{faster_rcnn_forward.4} parent=31 // pred_fallthru
        _
    $region32: #{faster_rcnn_forward.4} parent=5 // pred_fallthru
      _
    %p188 = scmp.le.s32.totalorder 1, %s11
    %p189 = scmp.lt.s32.totalorder %s11, 3
    %p190 = pnand %p188, %p189
    %p191 = pneg %p190
    // Predicated region
    $region37: #{faster_rcnn_forward.4} parent=5 // pred_check
      _
    $region38: #{faster_rcnn_forward.4} parent=5 // pred_check_branch
      %193 = sbr.rel (%p190) target = $region40
    $region39: #{faster_rcnn_forward.4} parent=5 // pred_region
      %s194 = ssub.s32 %s11, 1
      %s195 = smul.u32 32, %s16
      %p196 = scmp.lt.s32.totalorder %s195, 63
      %s197 = scalar_select %p196, %s195, 63
      %s198 = smul.addr %s197, 3
      %s199 = smul.addr %s198, 4
      %s200 = scalar_lea.vmem %s0, %s199
      %p201 = pneg %p37
      %p202 = pneg %p34
      %p203 = pneg %p58
      %p204 = pneg %p55
      %p205 = pneg %p79
      %p206 = pneg %p76
      %p207 = pneg %p100
      %p208 = pneg %p97
      %p209 = pneg %p121
      %p210 = pneg %p118
      %p211 = pneg %p147
      %p212 = pneg %p144
      %s213 = smul.u32 32, %s16
      %p214 = scmp.lt.s32.totalorder %s213, 63
      %s215 = scalar_select %p214, %s213, 63
      %s216 = smul.addr %s215, 8
      %s217 = scalar_lea.vmem %s5, %s216
      %s218 = smul.u32 32, %s16
      %p219 = scmp.lt.s32.totalorder %s218, 63
      %s220 = scalar_select %p219, %s218, 63
      %s221 = smul.addr %s220, 3
      %s222 = smul.addr %s221, 4
      %s223 = scalar_lea.vmem %s0, %s222
      %s224 = smul.u32 32, %s16
      %s225 = smul.u32 32, %s16
      %p226 = scmp.lt.s32.totalorder %s225, 63
      %s227 = scalar_select %p226, %s225, 63
      %s228 = smul.addr %s227, 8
      %s229 = scalar_lea.vmem %s5, %s228
      %s230 = smul.u32 32, %s16
      %v232 = vld [vmem:[%s223] sm:$0xff]
      %v233 = vld [vmem:[%s223 + $0x8] sm:$0xf]
      %v234 = vld [vmem:[%s223 + $0xc] sm:$0xff]
      %v235 = vld [vmem:[%s223 + $0x14] sm:$0xf]
      %v236 = vld [vmem:[%s223 + $0x18] sm:$0xff]
      %v237 = vld [vmem:[%s223 + $0x20] sm:$0xf]
      %v238 = vld [vmem:[%s223 + $0x24] sm:$0xff]
      %v239 = vld [vmem:[%s223 + $0x2c] sm:$0xf]
      %v240 = vld [vmem:[%s223 + $0x30] sm:$0xff]
      %v241 = vld [vmem:[%s223 + $0x38] sm:$0xf]
      %v242 = vld [vmem:[%s223 + $0x3c] sm:$0xff]
      %v243 = vld [vmem:[%s223 + $0x44] sm:$0xf]
      %v244 = vld [vmem:[%s223 + $0x48] sm:$0xff]
      %v245 = vld [vmem:[%s223 + $0x50] sm:$0xf]
      %v246 = vld [vmem:[%s223 + $0x54] sm:$0xff]
      %v247 = vld [vmem:[%s223 + $0x5c] sm:$0xf]
      %v248 = vld [vmem:[%s223 + $0x60] sm:$0xff]
      %v249 = vld [vmem:[%s223 + $0x68] sm:$0xf]
      %v250 = vld [vmem:[%s223 + $0x6c] sm:$0xff]
      %v251 = vld [vmem:[%s223 + $0x74] sm:$0xf]
      %v252 = vld [vmem:[%s223 + $0x78] sm:$0xff]
      %v253 = vld [vmem:[%s223 + $0x80] sm:$0xf]
      %v254 = vld [vmem:[%s223 + $0x84] sm:$0xff]
      %v255 = vld [vmem:[%s223 + $0x8c] sm:$0xf]
      %v256 = vld [vmem:[%s223 + $0x90] sm:$0xff]
      %v257 = vld [vmem:[%s223 + $0x98] sm:$0xf]
      %v258 = vld [vmem:[%s223 + $0x9c] sm:$0xff]
      %v259 = vld [vmem:[%s223 + $0xa4] sm:$0xf]
      %v260 = vld [vmem:[%s223 + $0xa8] sm:$0xff]
      %v261 = vld [vmem:[%s223 + $0xb0] sm:$0xf]
      %v262 = vld [vmem:[%s223 + $0xb4] sm:$0xff]
      %v263 = vld [vmem:[%s223 + $0xbc] sm:$0xf]
      %v264 = vld [vmem:[%s223 + $0xc0] sm:$0xff]
      %v265 = vld [vmem:[%s223 + $0xc8] sm:$0xf]
      %v266 = vld [vmem:[%s223 + $0xcc] sm:$0xff]
      %v267 = vld [vmem:[%s223 + $0xd4] sm:$0xf]
      %v268 = vld [vmem:[%s223 + $0xd8] sm:$0xff]
      %v269 = vld [vmem:[%s223 + $0xe0] sm:$0xf]
      %v270 = vld [vmem:[%s223 + $0xe4] sm:$0xff]
      %v271 = vld [vmem:[%s223 + $0xec] sm:$0xf]
      %v272 = vld [vmem:[%s223 + $0xf0] sm:$0xff]
      %v273 = vld [vmem:[%s223 + $0xf8] sm:$0xf]
      %v274 = vld [vmem:[%s223 + $0xfc] sm:$0xff]
      %v275 = vld [vmem:[%s223 + $0x104] sm:$0xf]
      %v276 = vld [vmem:[%s223 + $0x108] sm:$0xff]
      %v277 = vld [vmem:[%s223 + $0x110] sm:$0xf]
      %v278 = vld [vmem:[%s223 + $0x114] sm:$0xff]
      %v279 = vld [vmem:[%s223 + $0x11c] sm:$0xf]
      %v280 = vld [vmem:[%s223 + $0x120] sm:$0xff]
      %v281 = vld [vmem:[%s223 + $0x128] sm:$0xf]
      %v282 = vld [vmem:[%s223 + $0x12c] sm:$0xff]
      %v283 = vld [vmem:[%s223 + $0x134] sm:$0xf]
      %v284 = vld [vmem:[%s223 + $0x138] sm:$0xff]
      %v285 = vld [vmem:[%s223 + $0x140] sm:$0xf]
      %v286 = vld [vmem:[%s223 + $0x144] sm:$0xff]
      %v287 = vld [vmem:[%s223 + $0x14c] sm:$0xf]
      %v288 = vld [vmem:[%s223 + $0x150] sm:$0xff]
      %v289 = vld [vmem:[%s223 + $0x158] sm:$0xf]
      %v290 = vld [vmem:[%s223 + $0x15c] sm:$0xff]
      %v291 = vld [vmem:[%s223 + $0x164] sm:$0xf]
      %v292 = vld [vmem:[%s223 + $0x168] sm:$0xff]
      %v293 = vld [vmem:[%s223 + $0x170] sm:$0xf]
      %v294 = vld [vmem:[%s223 + $0x174] sm:$0xff]
      %v295 = vld [vmem:[%s223 + $0x17c] sm:$0xf]
      %v296 = vld [vmem:[%s1] sm:$0xf]
      %v297 = vld [vmem:[%s1 + $0x4] sm:$0xf]
      %v298 = vld [vmem:[%s1 + $0x8] sm:$0xf]
      %v299 = vld [vmem:[%s1 + $0xc] sm:$0xf]
      %v300 = vld [vmem:[%s1 + $0x10] sm:$0xf]
      %v301 = vld [vmem:[%s1 + $0x14] sm:$0xf]
      %v302 = vld [vmem:[%s1 + $0x18] sm:$0xf]
      %v303 = vld [vmem:[%s1 + $0x1c] sm:$0xf]
      %v304 = vld [vmem:[%s1 + $0x20] sm:$0xf]
      %v305 = vld [vmem:[%s1 + $0x24] sm:$0xf]
      %v306 = vld [vmem:[%s1 + $0x28] sm:$0xf]
      %v307 = vld [vmem:[%s1 + $0x2c] sm:$0xf]
      %v308 = vld [vmem:[%s1 + $0x30] sm:$0xf]
      %v309 = vld [vmem:[%s1 + $0x34] sm:$0xf]
      %v310 = vld [vmem:[%s1 + $0x38] sm:$0xf]
      %v311 = vld [vmem:[%s1 + $0x3c] sm:$0xf]
      %v312 = vld [vmem:[%s1 + $0x40] sm:$0xf]
      %v313 = vld [vmem:[%s1 + $0x44] sm:$0xf]
      %v314 = vld [vmem:[%s1 + $0x48] sm:$0xf]
      %v315 = vld [vmem:[%s1 + $0x4c] sm:$0xf]
      %v316 = vld [vmem:[%s1 + $0x50] sm:$0xf]
      %v317 = vld [vmem:[%s1 + $0x54] sm:$0xf]
      %v318 = vld [vmem:[%s1 + $0x58] sm:$0xf]
      %v319 = vld [vmem:[%s1 + $0x5c] sm:$0xf]
      %v320 = vld [vmem:[%s1 + $0x60] sm:$0xf]
      %v321 = vld [vmem:[%s1 + $0x64] sm:$0xf]
      %v322 = vld [vmem:[%s1 + $0x68] sm:$0xf]
      %v323 = vld [vmem:[%s1 + $0x6c] sm:$0xf]
      %v324 = vld [vmem:[%s1 + $0x70] sm:$0xf]
      %v325 = vld [vmem:[%s1 + $0x74] sm:$0xf]
      %v326 = vld [vmem:[%s1 + $0x78] sm:$0xf]
      %v327 = vld [vmem:[%s1 + $0x7c] sm:$0xf]
      %v328 = vld [vmem:[%s1 + $0x80] sm:$0xf]
      %v329 = vld [vmem:[%s1 + $0x84] sm:$0xf]
      %v330 = vld [vmem:[%s1 + $0x88] sm:$0xf]
      %v331 = vld [vmem:[%s1 + $0x8c] sm:$0xf]
      %v332 = vld [vmem:[%s2] sm:$0x1]
      %v334 = vlaneseq
      %v335 = vshrl.u32 %v334, 7
      %v336 = vsub.s32 0, %v335
      %v337 = vrot.slane %v332, %v336
      %v403 = vunpack.c.l.b16 %v232
      %v404 = vunpack.c.h.b16 %v232
      %v405 = vunpack.c.l.b16 %v233
      %v406 = vunpack.c.l.b16 %v234
      %v407 = vunpack.c.h.b16 %v234
      %v408 = vunpack.c.l.b16 %v235
      %v409 = vunpack.c.l.b16 %v236
      %v410 = vunpack.c.h.b16 %v236
      %v411 = vunpack.c.l.b16 %v237
      %v412 = vunpack.c.l.b16 %v238
      %v413 = vunpack.c.h.b16 %v238
      %v414 = vunpack.c.l.b16 %v239
      %v415 = vunpack.c.l.b16 %v240
      %v416 = vunpack.c.h.b16 %v240
      %v417 = vunpack.c.l.b16 %v241
      %v418 = vunpack.c.l.b16 %v242
      %v419 = vunpack.c.h.b16 %v242
      %v420 = vunpack.c.l.b16 %v243
      %v421 = vunpack.c.l.b16 %v244
      %v422 = vunpack.c.h.b16 %v244
      %v423 = vunpack.c.l.b16 %v245
      %v424 = vunpack.c.l.b16 %v246
      %v425 = vunpack.c.h.b16 %v246
      %v426 = vunpack.c.l.b16 %v247
      %v427 = vunpack.c.l.b16 %v248
      %v428 = vunpack.c.h.b16 %v248
      %v429 = vunpack.c.l.b16 %v249
      %v430 = vunpack.c.l.b16 %v250
      %v431 = vunpack.c.h.b16 %v250
      %v432 = vunpack.c.l.b16 %v251
      %v433 = vunpack.c.l.b16 %v252
      %v434 = vunpack.c.h.b16 %v252
      %v435 = vunpack.c.l.b16 %v253
      %v436 = vunpack.c.l.b16 %v254
      %v437 = vunpack.c.h.b16 %v254
      %v438 = vunpack.c.l.b16 %v255
      %v439 = vunpack.c.l.b16 %v256
      %v440 = vunpack.c.h.b16 %v256
      %v441 = vunpack.c.l.b16 %v257
      %v442 = vunpack.c.l.b16 %v258
      %v443 = vunpack.c.h.b16 %v258
      %v444 = vunpack.c.l.b16 %v259
      %v445 = vunpack.c.l.b16 %v260
      %v446 = vunpack.c.h.b16 %v260
      %v447 = vunpack.c.l.b16 %v261
      %v448 = vunpack.c.l.b16 %v262
      %v449 = vunpack.c.h.b16 %v262
      %v450 = vunpack.c.l.b16 %v263
      %v451 = vunpack.c.l.b16 %v264
      %v452 = vunpack.c.h.b16 %v264
      %v453 = vunpack.c.l.b16 %v265
      %v454 = vunpack.c.l.b16 %v266
      %v455 = vunpack.c.h.b16 %v266
      %v456 = vunpack.c.l.b16 %v267
      %v457 = vunpack.c.l.b16 %v268
      %v458 = vunpack.c.h.b16 %v268
      %v459 = vunpack.c.l.b16 %v269
      %v460 = vunpack.c.l.b16 %v270
      %v461 = vunpack.c.h.b16 %v270
      %v462 = vunpack.c.l.b16 %v271
      %v463 = vunpack.c.l.b16 %v272
      %v464 = vunpack.c.h.b16 %v272
      %v465 = vunpack.c.l.b16 %v273
      %v466 = vunpack.c.l.b16 %v274
      %v467 = vunpack.c.h.b16 %v274
      %v468 = vunpack.c.l.b16 %v275
      %v469 = vunpack.c.l.b16 %v276
      %v470 = vunpack.c.h.b16 %v276
      %v471 = vunpack.c.l.b16 %v277
      %v472 = vunpack.c.l.b16 %v278
      %v473 = vunpack.c.h.b16 %v278
      %v474 = vunpack.c.l.b16 %v279
      %v475 = vunpack.c.l.b16 %v280
      %v476 = vunpack.c.h.b16 %v280
      %v477 = vunpack.c.l.b16 %v281
      %v478 = vunpack.c.l.b16 %v282
      %v479 = vunpack.c.h.b16 %v282
      %v480 = vunpack.c.l.b16 %v283
      %v481 = vunpack.c.l.b16 %v284
      %v482 = vunpack.c.h.b16 %v284
      %v483 = vunpack.c.l.b16 %v285
      %v484 = vunpack.c.l.b16 %v286
      %v485 = vunpack.c.h.b16 %v286
      %v486 = vunpack.c.l.b16 %v287
      %v487 = vunpack.c.l.b16 %v288
      %v488 = vunpack.c.h.b16 %v288
      %v489 = vunpack.c.l.b16 %v289
      %v490 = vunpack.c.l.b16 %v290
      %v491 = vunpack.c.h.b16 %v290
      %v492 = vunpack.c.l.b16 %v291
      %v493 = vunpack.c.l.b16 %v292
      %v494 = vunpack.c.h.b16 %v292
      %v495 = vunpack.c.l.b16 %v293
      %v496 = vunpack.c.l.b16 %v294
      %v497 = vunpack.c.h.b16 %v294
      %v498 = vunpack.c.l.b16 %v295
      %v499 = vpack.c.b16 %v406, %v403
      %v500 = vpack.c.b16 %v407, %v404
      %v501 = vpack.c.b16 %v408, %v405
      %v502 = vpack.c.b16 %v412, %v409
      %v503 = vpack.c.b16 %v413, %v410
      %v504 = vpack.c.b16 %v414, %v411
      %v505 = vpack.c.b16 %v418, %v415
      %v506 = vpack.c.b16 %v419, %v416
      %v507 = vpack.c.b16 %v420, %v417
      %v508 = vpack.c.b16 %v424, %v421
      %v509 = vpack.c.b16 %v425, %v422
      %v510 = vpack.c.b16 %v426, %v423
      %v511 = vpack.c.b16 %v430, %v427
      %v512 = vpack.c.b16 %v431, %v428
      %v513 = vpack.c.b16 %v432, %v429
      %v514 = vpack.c.b16 %v436, %v433
      %v515 = vpack.c.b16 %v437, %v434
      %v516 = vpack.c.b16 %v438, %v435
      %v517 = vpack.c.b16 %v442, %v439
      %v518 = vpack.c.b16 %v443, %v440
      %v519 = vpack.c.b16 %v444, %v441
      %v520 = vpack.c.b16 %v448, %v445
      %v521 = vpack.c.b16 %v449, %v446
      %v522 = vpack.c.b16 %v450, %v447
      %v523 = vpack.c.b16 %v454, %v451
      %v524 = vpack.c.b16 %v455, %v452
      %v525 = vpack.c.b16 %v456, %v453
      %v526 = vpack.c.b16 %v460, %v457
      %v527 = vpack.c.b16 %v461, %v458
      %v528 = vpack.c.b16 %v462, %v459
      %v529 = vpack.c.b16 %v466, %v463
      %v530 = vpack.c.b16 %v467, %v464
      %v531 = vpack.c.b16 %v468, %v465
      %v532 = vpack.c.b16 %v472, %v469
      %v533 = vpack.c.b16 %v473, %v470
      %v534 = vpack.c.b16 %v474, %v471
      %v535 = vpack.c.b16 %v478, %v475
      %v536 = vpack.c.b16 %v479, %v476
      %v537 = vpack.c.b16 %v480, %v477
      %v538 = vpack.c.b16 %v484, %v481
      %v539 = vpack.c.b16 %v485, %v482
      %v540 = vpack.c.b16 %v486, %v483
      %v541 = vpack.c.b16 %v490, %v487
      %v542 = vpack.c.b16 %v491, %v488
      %v543 = vpack.c.b16 %v492, %v489
      %v544 = vpack.c.b16 %v496, %v493
      %v545 = vpack.c.b16 %v497, %v494
      %v546 = vpack.c.b16 %v498, %v495
      %v615 = vunpack.c.l.b16 %v296
      %v616 = vunpack.c.l.b16 %v297
      %v617 = vunpack.c.l.b16 %v298
      %v618 = vunpack.c.l.b16 %v299
      %v619 = vunpack.c.l.b16 %v300
      %v620 = vunpack.c.l.b16 %v301
      %v621 = vunpack.c.l.b16 %v302
      %v622 = vunpack.c.l.b16 %v303
      %v623 = vunpack.c.l.b16 %v304
      %v624 = vunpack.c.l.b16 %v305
      %v625 = vunpack.c.l.b16 %v306
      %v626 = vunpack.c.l.b16 %v307
      %v627 = vunpack.c.l.b16 %v308
      %v628 = vunpack.c.l.b16 %v309
      %v629 = vunpack.c.l.b16 %v310
      %v630 = vunpack.c.l.b16 %v311
      %v631 = vunpack.c.l.b16 %v312
      %v632 = vunpack.c.l.b16 %v313
      %v633 = vunpack.c.l.b16 %v314
      %v634 = vunpack.c.l.b16 %v315
      %v635 = vunpack.c.l.b16 %v316
      %v636 = vunpack.c.l.b16 %v317
      %v637 = vunpack.c.l.b16 %v318
      %v638 = vunpack.c.l.b16 %v319
      %v639 = vunpack.c.l.b16 %v320
      %v640 = vunpack.c.l.b16 %v321
      %v641 = vunpack.c.l.b16 %v322
      %v642 = vunpack.c.l.b16 %v323
      %v643 = vunpack.c.l.b16 %v324
      %v644 = vunpack.c.l.b16 %v325
      %v645 = vunpack.c.l.b16 %v326
      %v646 = vunpack.c.l.b16 %v327
      %v647 = vunpack.c.l.b16 %v328
      %v648 = vunpack.c.l.b16 %v329
      %v649 = vunpack.c.l.b16 %v330
      %v650 = vunpack.c.l.b16 %v331
      %v651 = vpack.c.b16 %v616, %v615
      %v652 = vpack.c.b16 %v618, %v617
      %v653 = vpack.c.b16 %v620, %v619
      %v654 = vpack.c.b16 %v622, %v621
      %v655 = vpack.c.b16 %v624, %v623
      %v656 = vpack.c.b16 %v626, %v625
      %v657 = vpack.c.b16 %v628, %v627
      %v658 = vpack.c.b16 %v630, %v629
      %v659 = vpack.c.b16 %v632, %v631
      %v660 = vpack.c.b16 %v634, %v633
      %v661 = vpack.c.b16 %v636, %v635
      %v662 = vpack.c.b16 %v638, %v637
      %v663 = vpack.c.b16 %v640, %v639
      %v664 = vpack.c.b16 %v642, %v641
      %v665 = vpack.c.b16 %v644, %v643
      %v666 = vpack.c.b16 %v646, %v645
      %v667 = vpack.c.b16 %v648, %v647
      %v668 = vpack.c.b16 %v650, %v649
      %vm687 = vcmask 261120
      %v689 = vsel %vm687, %v501, 0
      %v692 = vsel %vm687, %v504, 0
      %v695 = vsel %vm687, %v507, 0
      %v698 = vsel %vm687, %v510, 0
      %v701 = vsel %vm687, %v513, 0
      %v704 = vsel %vm687, %v516, 0
      %v707 = vsel %vm687, %v519, 0
      %v710 = vsel %vm687, %v522, 0
      %v713 = vsel %vm687, %v525, 0
      %v716 = vsel %vm687, %v528, 0
      %v719 = vsel %vm687, %v531, 0
      %v722 = vsel %vm687, %v534, 0
      %v725 = vsel %vm687, %v537, 0
      %v728 = vsel %vm687, %v540, 0
      %v731 = vsel %vm687, %v543, 0
      %v734 = vsel %vm687, %v546, 0
      %736 = vmatprep.subr.bf16.mxu0 0
      %737 = vmatpush1.bf16.msra.mxu0 %v651
      %738 = vmatprep.subr.bf16.mxu0 0
      %739 = vmatpush1.bf16.msra.mxu0 %v652
      %740 = vmatprep.subr.bf16.mxu0 0
      %741 = vmatpush1.bf16.msra.mxu0 %v653
      %742 = vmatprep.subr.bf16.mxu0 0
      %743 = vmatpush1.bf16.msra.mxu0 %v654
      %744 = vmatprep.subr.bf16.mxu0 0
      %745 = vmatpush1.bf16.msra.mxu0 %v655
      %746 = vmatprep.subr.bf16.mxu0 0
      %747 = vmatpush1.bf16.msra.mxu0 %v656
      %748 = vmatprep.subr.bf16.mxu0 0
      %749 = vmatpush1.bf16.msra.mxu0 %v657
      %750 = vmatprep.subr.bf16.mxu0 0
      %751 = vmatpush1.bf16.msra.mxu0 %v658
      %752 = vmatprep.subr.bf16.mxu0 0
      %753 = vmatpush1.bf16.msra.mxu0 %v659
      %754 = vmatprep.subr.bf16.mxu0 0
      %755 = vmatpush1.bf16.msra.mxu0 %v660
      %756 = vmatprep.subr.bf16.mxu0 0
      %757 = vmatpush1.bf16.msra.mxu0 %v661
      %758 = vmatprep.subr.bf16.mxu0 0
      %759 = vmatpush1.bf16.msra.mxu0 %v662
      %760 = vmatprep.subr.bf16.mxu0 0
      %761 = vmatpush1.bf16.msra.mxu0 %v663
      %762 = vmatprep.subr.bf16.mxu0 0
      %763 = vmatpush1.bf16.msra.mxu0 %v664
      %764 = vmatprep.subr.bf16.mxu0 0
      %765 = vmatpush1.bf16.msra.mxu0 %v665
      %766 = vmatprep.subr.bf16.mxu0 0
      %767 = vmatpush1.bf16.msra.mxu0 %v666
      %768 = vmatprep.mubr.bf16.mxu0 %v500
      %769 = vmatmul.mubr.bf16.gmra.mrb[0].mxu0 %v499
      %v770 = vpop.f32.mrb[0].mxu0
      %v771 = vadd.f32 %v337, %v770
      %v772 = vpop.f32.mrb[0].mxu0
      %v773 = vpop.f32.mrb[0].mxu0
      %v774 = vadd.f32 %v337, %v773
      %v775 = vpop.f32.mrb[0].mxu0
      %776 = vmatprep.mubr.bf16.mxu0 %v503
      %777 = vmatmul.mubr.bf16.gmra.mrb[0].mxu0 %v502
      %v778 = vpop.f32.mrb[0].mxu0
      %v779 = vadd.f32 %v337, %v778
      %v780 = vpop.f32.mrb[0].mxu0
      %v781 = vpop.f32.mrb[0].mxu0
      %v782 = vadd.f32 %v337, %v781
      %v783 = vpop.f32.mrb[0].mxu0
      %784 = vmatprep.mubr.bf16.mxu0 %v506
      %785 = vmatmul.mubr.bf16.gmra.mrb[0].mxu0 %v505
      %v786 = vpop.f32.mrb[0].mxu0
      %v787 = vadd.f32 %v337, %v786
      %v788 = vpop.f32.mrb[0].mxu0
      %v789 = vpop.f32.mrb[0].mxu0
      %v790 = vadd.f32 %v337, %v789
      %v791 = vpop.f32.mrb[0].mxu0
      %792 = vmatprep.mubr.bf16.mxu0 %v509
      %793 = vmatmul.mubr.bf16.gmra.mrb[0].mxu0 %v508
      %v794 = vpop.f32.mrb[0].mxu0
      %v795 = vadd.f32 %v337, %v794
      %v796 = vpop.f32.mrb[0].mxu0
      %v797 = vpop.f32.mrb[0].mxu0
      %v798 = vadd.f32 %v337, %v797
      %v799 = vpop.f32.mrb[0].mxu0
      %800 = vmatprep.mubr.bf16.mxu0 %v512
      %801 = vmatmul.mubr.bf16.gmra.mrb[0].mxu0 %v511
      %v802 = vpop.f32.mrb[0].mxu0
      %v803 = vadd.f32 %v337, %v802
      %v804 = vpop.f32.mrb[0].mxu0
      %v805 = vpop.f32.mrb[0].mxu0
      %v806 = vadd.f32 %v337, %v805
      %v807 = vpop.f32.mrb[0].mxu0
      %808 = vmatprep.mubr.bf16.mxu0 %v515
      %809 = vmatmul.mubr.bf16.gmra.mrb[0].mxu0 %v514
      %v810 = vpop.f32.mrb[0].mxu0
      %v811 = vadd.f32 %v337, %v810
      %v812 = vpop.f32.mrb[0].mxu0
      %v813 = vpop.f32.mrb[0].mxu0
      %v814 = vadd.f32 %v337, %v813
      %v815 = vpop.f32.mrb[0].mxu0
      %816 = vmatprep.mubr.bf16.mxu0 %v518
      %817 = vmatmul.mubr.bf16.gmra.mrb[0].mxu0 %v517
      %v818 = vpop.f32.mrb[0].mxu0
      %v819 = vadd.f32 %v337, %v818
      %v820 = vpop.f32.mrb[0].mxu0
      %v821 = vpop.f32.mrb[0].mxu0
      %v822 = vadd.f32 %v337, %v821
      %v823 = vpop.f32.mrb[0].mxu0
      %824 = vmatprep.mubr.bf16.mxu0 %v521
      %825 = vmatmul.mubr.bf16.gmra.mrb[0].mxu0 %v520
      %v826 = vpop.f32.mrb[0].mxu0
      %v827 = vadd.f32 %v337, %v826
      %v828 = vpop.f32.mrb[0].mxu0
      %v829 = vpop.f32.mrb[0].mxu0
      %v830 = vadd.f32 %v337, %v829
      %v831 = vpop.f32.mrb[0].mxu0
      %832 = vmatprep.mubr.bf16.mxu0 %v524
      %833 = vmatmul.mubr.bf16.gmra.mrb[0].mxu0 %v523
      %v834 = vpop.f32.mrb[0].mxu0
      %v835 = vadd.f32 %v337, %v834
      %v836 = vpop.f32.mrb[0].mxu0
      %v837 = vpop.f32.mrb[0].mxu0
      %v838 = vadd.f32 %v337, %v837
      %v839 = vpop.f32.mrb[0].mxu0
      %840 = vmatprep.mubr.bf16.mxu0 %v527
      %841 = vmatmul.mubr.bf16.gmra.mrb[0].mxu0 %v526
      %v842 = vpop.f32.mrb[0].mxu0
      %v843 = vadd.f32 %v337, %v842
      %v844 = vpop.f32.mrb[0].mxu0
      %v845 = vpop.f32.mrb[0].mxu0
      %v846 = vadd.f32 %v337, %v845
      %v847 = vpop.f32.mrb[0].mxu0
      %848 = vmatprep.mubr.bf16.mxu0 %v530
      %849 = vmatmul.mubr.bf16.gmra.mrb[0].mxu0 %v529
      %v850 = vpop.f32.mrb[0].mxu0
      %v851 = vadd.f32 %v337, %v850
      %v852 = vpop.f32.mrb[0].mxu0
      %v853 = vpop.f32.mrb[0].mxu0
      %v854 = vadd.f32 %v337, %v853
      %v855 = vpop.f32.mrb[0].mxu0
      %856 = vmatprep.mubr.bf16.mxu0 %v533
      %857 = vmatmul.mubr.bf16.gmra.mrb[0].mxu0 %v532
      %v858 = vpop.f32.mrb[0].mxu0
      %v859 = vadd.f32 %v337, %v858
      %v860 = vpop.f32.mrb[0].mxu0
      %v861 = vpop.f32.mrb[0].mxu0
      %v862 = vadd.f32 %v337, %v861
      %v863 = vpop.f32.mrb[0].mxu0
      %864 = vmatprep.mubr.bf16.mxu0 %v536
      %865 = vmatmul.mubr.bf16.gmra.mrb[0].mxu0 %v535
      %v866 = vpop.f32.mrb[0].mxu0
      %v867 = vadd.f32 %v337, %v866
      %v868 = vpop.f32.mrb[0].mxu0
      %v869 = vpop.f32.mrb[0].mxu0
      %v870 = vadd.f32 %v337, %v869
      %v871 = vpop.f32.mrb[0].mxu0
      %872 = vmatprep.mubr.bf16.mxu0 %v539
      %873 = vmatmul.mubr.bf16.gmra.mrb[0].mxu0 %v538
      %v874 = vpop.f32.mrb[0].mxu0
      %v875 = vadd.f32 %v337, %v874
      %v876 = vpop.f32.mrb[0].mxu0
      %v877 = vpop.f32.mrb[0].mxu0
      %v878 = vadd.f32 %v337, %v877
      %v879 = vpop.f32.mrb[0].mxu0
      %880 = vmatprep.mubr.bf16.mxu0 %v542
      %881 = vmatmul.mubr.bf16.gmra.mrb[0].mxu0 %v541
      %v882 = vpop.f32.mrb[0].mxu0
      %v883 = vadd.f32 %v337, %v882
      %v884 = vpop.f32.mrb[0].mxu0
      %v885 = vpop.f32.mrb[0].mxu0
      %v886 = vadd.f32 %v337, %v885
      %v887 = vpop.f32.mrb[0].mxu0
      %888 = vmatprep.mubr.bf16.mxu0 %v545
      %889 = vmatmul.mubr.bf16.gmra.mrb[0].mxu0 %v544
      %v890 = vpop.f32.mrb[0].mxu0
      %v891 = vadd.f32 %v337, %v890
      %v892 = vpop.f32.mrb[0].mxu0
      %v893 = vpop.f32.mrb[0].mxu0
      %v894 = vadd.f32 %v337, %v893
      %v895 = vpop.f32.mrb[0].mxu0
      %896 = vdwg.mxu0
      %897 = vmatprep.subr.bf16.mxu0 0
      %898 = vmatpush1.bf16.msra.mxu0 %v667
      %899 = vmatprep.subr.bf16.mxu0 0
      %900 = vmatpush1.bf16.msra.mxu0 %v668
      %901 = vmatprep.subr.bf16.mxu0 0
      %902 = vmatpush1.bf16.msra.mxu0 0
      %903 = vmatprep.subr.bf16.mxu0 0
      %904 = vmatpush1.bf16.msra.mxu0 0
      %905 = vmatprep.subr.bf16.mxu0 0
      %906 = vmatpush1.bf16.msra.mxu0 0
      %907 = vmatprep.subr.bf16.mxu0 0
      %908 = vmatpush1.bf16.msra.mxu0 0
      %909 = vmatprep.subr.bf16.mxu0 0
      %910 = vmatpush1.bf16.msra.mxu0 0
      %911 = vmatprep.subr.bf16.mxu0 0
      %912 = vmatpush1.bf16.msra.mxu0 0
      %913 = vmatprep.subr.bf16.mxu0 0
      %914 = vmatpush1.bf16.msra.mxu0 0
      %915 = vmatprep.subr.bf16.mxu0 0
      %916 = vmatpush1.bf16.msra.mxu0 0
      %917 = vmatprep.subr.bf16.mxu0 0
      %918 = vmatpush1.bf16.msra.mxu0 0
      %919 = vmatprep.subr.bf16.mxu0 0
      %920 = vmatpush1.bf16.msra.mxu0 0
      %921 = vmatprep.subr.bf16.mxu0 0
      %922 = vmatpush1.bf16.msra.mxu0 0
      %923 = vmatprep.subr.bf16.mxu0 0
      %924 = vmatpush1.bf16.msra.mxu0 0
      %925 = vmatprep.subr.bf16.mxu0 0
      %926 = vmatpush1.bf16.msra.mxu0 0
      %927 = vmatprep.subr.bf16.mxu0 0
      %928 = vmatpush1.bf16.msra.mxu0 0
      %929 = vmatprep.mubr.bf16.mxu0 0
      %930 = vmatmul.mubr.bf16.gmra.mrb[0].mxu0 %v689
      %v931 = vpop.f32.mrb[0].mxu0
      %v932 = vadd.f32 %v771, %v931
      %v933 = vpop.f32.mrb[0].mxu0
      %v934 = vpop.f32.mrb[0].mxu0
      %v935 = vadd.f32 %v774, %v934
      %v936 = vpop.f32.mrb[0].mxu0
      %937 = vmatprep.mubr.bf16.mxu0 0
      %938 = vmatmul.mubr.bf16.gmra.mrb[0].mxu0 %v692
      %v939 = vpop.f32.mrb[0].mxu0
      %v940 = vadd.f32 %v779, %v939
      %v941 = vpop.f32.mrb[0].mxu0
      %v942 = vpop.f32.mrb[0].mxu0
      %v943 = vadd.f32 %v782, %v942
      %v944 = vpop.f32.mrb[0].mxu0
      %945 = vmatprep.mubr.bf16.mxu0 0
      %946 = vmatmul.mubr.bf16.gmra.mrb[0].mxu0 %v695
      %v947 = vpop.f32.mrb[0].mxu0
      %v948 = vadd.f32 %v787, %v947
      %v949 = vpop.f32.mrb[0].mxu0
      %v950 = vpop.f32.mrb[0].mxu0
      %v951 = vadd.f32 %v790, %v950
      %v952 = vpop.f32.mrb[0].mxu0
      %953 = vmatprep.mubr.bf16.mxu0 0
      %954 = vmatmul.mubr.bf16.gmra.mrb[0].mxu0 %v698
      %v955 = vpop.f32.mrb[0].mxu0
      %v956 = vadd.f32 %v795, %v955
      %v957 = vpop.f32.mrb[0].mxu0
      %v958 = vpop.f32.mrb[0].mxu0
      %v959 = vadd.f32 %v798, %v958
      %v960 = vpop.f32.mrb[0].mxu0
      %961 = vmatprep.mubr.bf16.mxu0 0
      %962 = vmatmul.mubr.bf16.gmra.mrb[0].mxu0 %v701
      %v963 = vpop.f32.mrb[0].mxu0
      %v964 = vadd.f32 %v803, %v963
      %v965 = vpop.f32.mrb[0].mxu0
      %v966 = vpop.f32.mrb[0].mxu0
      %v967 = vadd.f32 %v806, %v966
      %v968 = vpop.f32.mrb[0].mxu0
      %969 = vmatprep.mubr.bf16.mxu0 0
      %970 = vmatmul.mubr.bf16.gmra.mrb[0].mxu0 %v704
      %v971 = vpop.f32.mrb[0].mxu0
      %v972 = vadd.f32 %v811, %v971
      %v973 = vpop.f32.mrb[0].mxu0
      %v974 = vpop.f32.mrb[0].mxu0
      %v975 = vadd.f32 %v814, %v974
      %v976 = vpop.f32.mrb[0].mxu0
      %977 = vmatprep.mubr.bf16.mxu0 0
      %978 = vmatmul.mubr.bf16.gmra.mrb[0].mxu0 %v707
      %v979 = vpop.f32.mrb[0].mxu0
      %v980 = vadd.f32 %v819, %v979
      %v981 = vpop.f32.mrb[0].mxu0
      %v982 = vpop.f32.mrb[0].mxu0
      %v983 = vadd.f32 %v822, %v982
      %v984 = vpop.f32.mrb[0].mxu0
      %985 = vmatprep.mubr.bf16.mxu0 0
      %986 = vmatmul.mubr.bf16.gmra.mrb[0].mxu0 %v710
      %v987 = vpop.f32.mrb[0].mxu0
      %v988 = vadd.f32 %v827, %v987
      %v989 = vpop.f32.mrb[0].mxu0
      %v990 = vpop.f32.mrb[0].mxu0
      %v991 = vadd.f32 %v830, %v990
      %v992 = vpop.f32.mrb[0].mxu0
      %993 = vmatprep.mubr.bf16.mxu0 0
      %994 = vmatmul.mubr.bf16.gmra.mrb[0].mxu0 %v713
      %v995 = vpop.f32.mrb[0].mxu0
      %v996 = vadd.f32 %v835, %v995
      %v997 = vpop.f32.mrb[0].mxu0
      %v998 = vpop.f32.mrb[0].mxu0
      %v999 = vadd.f32 %v838, %v998
      %v1000 = vpop.f32.mrb[0].mxu0
      %1001 = vmatprep.mubr.bf16.mxu0 0
      %1002 = vmatmul.mubr.bf16.gmra.mrb[0].mxu0 %v716
      %v1003 = vpop.f32.mrb[0].mxu0
      %v1004 = vadd.f32 %v843, %v1003
      %v1005 = vpop.f32.mrb[0].mxu0
      %v1006 = vpop.f32.mrb[0].mxu0
      %v1007 = vadd.f32 %v846, %v1006
      %v1008 = vpop.f32.mrb[0].mxu0
      %1009 = vmatprep.mubr.bf16.mxu0 0
      %1010 = vmatmul.mubr.bf16.gmra.mrb[0].mxu0 %v719
      %v1011 = vpop.f32.mrb[0].mxu0
      %v1012 = vadd.f32 %v851, %v1011
      %v1013 = vpop.f32.mrb[0].mxu0
      %v1014 = vpop.f32.mrb[0].mxu0
      %v1015 = vadd.f32 %v854, %v1014
      %v1016 = vpop.f32.mrb[0].mxu0
      %1017 = vmatprep.mubr.bf16.mxu0 0
      %1018 = vmatmul.mubr.bf16.gmra.mrb[0].mxu0 %v722
      %v1019 = vpop.f32.mrb[0].mxu0
      %v1020 = vadd.f32 %v859, %v1019
      %v1021 = vpop.f32.mrb[0].mxu0
      %v1022 = vpop.f32.mrb[0].mxu0
      %v1023 = vadd.f32 %v862, %v1022
      %v1024 = vpop.f32.mrb[0].mxu0
      %1025 = vmatprep.mubr.bf16.mxu0 0
      %1026 = vmatmul.mubr.bf16.gmra.mrb[0].mxu0 %v725
      %v1027 = vpop.f32.mrb[0].mxu0
      %v1028 = vadd.f32 %v867, %v1027
      %v1029 = vpop.f32.mrb[0].mxu0
      %v1030 = vpop.f32.mrb[0].mxu0
      %v1031 = vadd.f32 %v870, %v1030
      %v1032 = vpop.f32.mrb[0].mxu0
      %1033 = vmatprep.mubr.bf16.mxu0 0
      %1034 = vmatmul.mubr.bf16.gmra.mrb[0].mxu0 %v728
      %v1035 = vpop.f32.mrb[0].mxu0
      %v1036 = vadd.f32 %v875, %v1035
      %v1037 = vpop.f32.mrb[0].mxu0
      %v1038 = vpop.f32.mrb[0].mxu0
      %v1039 = vadd.f32 %v878, %v1038
      %v1040 = vpop.f32.mrb[0].mxu0
      %1041 = vmatprep.mubr.bf16.mxu0 0
      %1042 = vmatmul.mubr.bf16.gmra.mrb[0].mxu0 %v731
      %v1043 = vpop.f32.mrb[0].mxu0
      %v1044 = vadd.f32 %v883, %v1043
      %v1045 = vpop.f32.mrb[0].mxu0
      %v1046 = vpop.f32.mrb[0].mxu0
      %v1047 = vadd.f32 %v886, %v1046
      %v1048 = vpop.f32.mrb[0].mxu0
      %1049 = vmatprep.mubr.bf16.mxu0 0
      %1050 = vmatmul.mubr.bf16.gmra.mrb[0].mxu0 %v734
      %v1051 = vpop.f32.mrb[0].mxu0
      %v1052 = vadd.f32 %v891, %v1051
      %v1053 = vpop.f32.mrb[0].mxu0
      %v1054 = vpop.f32.mrb[0].mxu0
      %v1055 = vadd.f32 %v894, %v1054
      %v1056 = vpop.f32.mrb[0].mxu0
      %1057 = vdwg.mxu0
      %v1058 = vmax.f32 %v932, 0.0
      %v1059 = vmax.f32 %v935, 0.0
      %v1060 = vmax.f32 %v940, 0.0
      %v1061 = vmax.f32 %v943, 0.0
      %v1062 = vmax.f32 %v948, 0.0
      %v1063 = vmax.f32 %v951, 0.0
      %v1064 = vmax.f32 %v956, 0.0
      %v1065 = vmax.f32 %v959, 0.0
      %v1066 = vmax.f32 %v964, 0.0
      %v1067 = vmax.f32 %v967, 0.0
      %v1068 = vmax.f32 %v972, 0.0
      %v1069 = vmax.f32 %v975, 0.0
      %v1070 = vmax.f32 %v980, 0.0
      %v1071 = vmax.f32 %v983, 0.0
      %v1072 = vmax.f32 %v988, 0.0
      %v1073 = vmax.f32 %v991, 0.0
      %v1074 = vmax.f32 %v996, 0.0
      %v1075 = vmax.f32 %v999, 0.0
      %v1076 = vmax.f32 %v1004, 0.0
      %v1077 = vmax.f32 %v1007, 0.0
      %v1078 = vmax.f32 %v1012, 0.0
      %v1079 = vmax.f32 %v1015, 0.0
      %v1080 = vmax.f32 %v1020, 0.0
      %v1081 = vmax.f32 %v1023, 0.0
      %v1082 = vmax.f32 %v1028, 0.0
      %v1083 = vmax.f32 %v1031, 0.0
      %v1084 = vmax.f32 %v1036, 0.0
      %v1085 = vmax.f32 %v1039, 0.0
      %v1086 = vmax.f32 %v1044, 0.0
      %v1087 = vmax.f32 %v1047, 0.0
      %v1088 = vmax.f32 %v1052, 0.0
      %v1089 = vmax.f32 %v1055, 0.0
      %v1090 = vpack.c.bf16 %v1059, %v1058
      %v1091 = vpack.c.bf16 %v1061, %v1060
      %v1092 = vpack.c.bf16 %v1063, %v1062
      %v1093 = vpack.c.bf16 %v1065, %v1064
      %v1094 = vpack.c.bf16 %v1067, %v1066
      %v1095 = vpack.c.bf16 %v1069, %v1068
      %v1096 = vpack.c.bf16 %v1071, %v1070
      %v1097 = vpack.c.bf16 %v1073, %v1072
      %v1098 = vpack.c.bf16 %v1075, %v1074
      %v1099 = vpack.c.bf16 %v1077, %v1076
      %v1100 = vpack.c.bf16 %v1079, %v1078
      %v1101 = vpack.c.bf16 %v1081, %v1080
      %v1102 = vpack.c.bf16 %v1083, %v1082
      %v1103 = vpack.c.bf16 %v1085, %v1084
      %v1104 = vpack.c.bf16 %v1087, %v1086
      %v1105 = vpack.c.bf16 %v1089, %v1088
      %v1106 = vld [vmem:[%s3] sm:$0xf]
      %v1107 = vld [vmem:[%s3 + $0x4] sm:$0xf]
      %v1108 = vld [vmem:[%s3 + $0x8] sm:$0xf]
      %v1109 = vld [vmem:[%s3 + $0xc] sm:$0xf]
      %v1110 = vld [vmem:[%s3 + $0x10] sm:$0xf]
      %v1111 = vld [vmem:[%s3 + $0x14] sm:$0xf]
      %v1112 = vld [vmem:[%s3 + $0x18] sm:$0xf]
      %v1113 = vld [vmem:[%s3 + $0x1c] sm:$0xf]
      %v1114 = vld [vmem:[%s3 + $0x20] sm:$0xf]
      %v1115 = vld [vmem:[%s3 + $0x24] sm:$0xf]
      %v1116 = vld [vmem:[%s3 + $0x28] sm:$0xf]
      %v1117 = vld [vmem:[%s3 + $0x2c] sm:$0xf]
      %v1118 = vld [vmem:[%s3 + $0x30] sm:$0xf]
      %v1119 = vld [vmem:[%s3 + $0x34] sm:$0xf]
      %v1120 = vld [vmem:[%s3 + $0x38] sm:$0xf]
      %v1121 = vld [vmem:[%s3 + $0x3c] sm:$0xf]
      %v1122 = vld [vmem:[%s4] sm:$0x1]
      %v1124 = vlaneseq
      %v1125 = vshrl.u32 %v1124, 7
      %v1126 = vsub.s32 0, %v1125
      %v1127 = vrot.slane %v1122, %v1126
      %v1145 = vunpack.c.l.b16 %v1106
      %v1146 = vunpack.c.l.b16 %v1107
      %v1147 = vunpack.c.l.b16 %v1108
      %v1148 = vunpack.c.l.b16 %v1109
      %v1149 = vunpack.c.l.b16 %v1110
      %v1150 = vunpack.c.l.b16 %v1111
      %v1151 = vunpack.c.l.b16 %v1112
      %v1152 = vunpack.c.l.b16 %v1113
      %v1153 = vunpack.c.l.b16 %v1114
      %v1154 = vunpack.c.l.b16 %v1115
      %v1155 = vunpack.c.l.b16 %v1116
      %v1156 = vunpack.c.l.b16 %v1117
      %v1157 = vunpack.c.l.b16 %v1118
      %v1158 = vunpack.c.l.b16 %v1119
      %v1159 = vunpack.c.l.b16 %v1120
      %v1160 = vunpack.c.l.b16 %v1121
      %v1161 = vpack.c.b16 %v1146, %v1145
      %v1162 = vpack.c.b16 %v1148, %v1147
      %v1163 = vpack.c.b16 %v1150, %v1149
      %v1164 = vpack.c.b16 %v1152, %v1151
      %v1165 = vpack.c.b16 %v1154, %v1153
      %v1166 = vpack.c.b16 %v1156, %v1155
      %v1167 = vpack.c.b16 %v1158, %v1157
      %v1168 = vpack.c.b16 %v1160, %v1159
      %1177 = vmatprep.subr.bf16.mxu0 0
      %1178 = vmatpush1.bf16.msra.mxu0 %v1161
      %1179 = vmatprep.subr.bf16.mxu0 0
      %1180 = vmatpush1.bf16.msra.mxu0 %v1162
      %1181 = vmatprep.subr.bf16.mxu0 0
      %1182 = vmatpush1.bf16.msra.mxu0 %v1163
      %1183 = vmatprep.subr.bf16.mxu0 0
      %1184 = vmatpush1.bf16.msra.mxu0 %v1164
      %1185 = vmatprep.subr.bf16.mxu0 0
      %1186 = vmatpush1.bf16.msra.mxu0 %v1165
      %1187 = vmatprep.subr.bf16.mxu0 0
      %1188 = vmatpush1.bf16.msra.mxu0 %v1166
      %1189 = vmatprep.subr.bf16.mxu0 0
      %1190 = vmatpush1.bf16.msra.mxu0 %v1167
      %1191 = vmatprep.subr.bf16.mxu0 0
      %1192 = vmatpush1.bf16.msra.mxu0 %v1168
      %1193 = vmatprep.subr.bf16.mxu0 0
      %1194 = vmatpush1.bf16.msra.mxu0 0
      %1195 = vmatprep.subr.bf16.mxu0 0
      %1196 = vmatpush1.bf16.msra.mxu0 0
      %1197 = vmatprep.subr.bf16.mxu0 0
      %1198 = vmatpush1.bf16.msra.mxu0 0
      %1199 = vmatprep.subr.bf16.mxu0 0
      %1200 = vmatpush1.bf16.msra.mxu0 0
      %1201 = vmatprep.subr.bf16.mxu0 0
      %1202 = vmatpush1.bf16.msra.mxu0 0
      %1203 = vmatprep.subr.bf16.mxu0 0
      %1204 = vmatpush1.bf16.msra.mxu0 0
      %1205 = vmatprep.subr.bf16.mxu0 0
      %1206 = vmatpush1.bf16.msra.mxu0 0
      %1207 = vmatprep.subr.bf16.mxu0 0
      %1208 = vmatpush1.bf16.msra.mxu0 0
      %1209 = vmatprep.mubr.bf16.mxu0 0
      %1210 = vmatmul.mubr.bf16.gmra.mrb[0].mxu0 %v1090
      %v1211 = vpop.f32.mrb[0].mxu0
      %v1212 = vadd.f32 %v1127, %v1211
      %v1213 = vpop.f32.mrb[0].mxu0
      %v1214 = vpop.f32.mrb[0].mxu0
      %v1215 = vadd.f32 %v1127, %v1214
      %v1216 = vpop.f32.mrb[0].mxu0
      %1217 = vmatprep.mubr.bf16.mxu0 0
      %1218 = vmatmul.mubr.bf16.gmra.mrb[0].mxu0 %v1091
      %v1219 = vpop.f32.mrb[0].mxu0
      %v1220 = vadd.f32 %v1127, %v1219
      %v1221 = vpop.f32.mrb[0].mxu0
      %v1222 = vpop.f32.mrb[0].mxu0
      %v1223 = vadd.f32 %v1127, %v1222
      %v1224 = vpop.f32.mrb[0].mxu0
      %1225 = vmatprep.mubr.bf16.mxu0 0
      %1226 = vmatmul.mubr.bf16.gmra.mrb[0].mxu0 %v1092
      %v1227 = vpop.f32.mrb[0].mxu0
      %v1228 = vadd.f32 %v1127, %v1227
      %v1229 = vpop.f32.mrb[0].mxu0
      %v1230 = vpop.f32.mrb[0].mxu0
      %v1231 = vadd.f32 %v1127, %v1230
      %v1232 = vpop.f32.mrb[0].mxu0
      %1233 = vmatprep.mubr.bf16.mxu0 0
      %1234 = vmatmul.mubr.bf16.gmra.mrb[0].mxu0 %v1093
      %v1235 = vpop.f32.mrb[0].mxu0
      %v1236 = vadd.f32 %v1127, %v1235
      %v1237 = vpop.f32.mrb[0].mxu0
      %v1238 = vpop.f32.mrb[0].mxu0
      %v1239 = vadd.f32 %v1127, %v1238
      %v1240 = vpop.f32.mrb[0].mxu0
      %1241 = vmatprep.mubr.bf16.mxu0 0
      %1242 = vmatmul.mubr.bf16.gmra.mrb[0].mxu0 %v1094
      %v1243 = vpop.f32.mrb[0].mxu0
      %v1244 = vadd.f32 %v1127, %v1243
      %v1245 = vpop.f32.mrb[0].mxu0
      %v1246 = vpop.f32.mrb[0].mxu0
      %v1247 = vadd.f32 %v1127, %v1246
      %v1248 = vpop.f32.mrb[0].mxu0
      %1249 = vmatprep.mubr.bf16.mxu0 0
      %1250 = vmatmul.mubr.bf16.gmra.mrb[0].mxu0 %v1095
      %v1251 = vpop.f32.mrb[0].mxu0
      %v1252 = vadd.f32 %v1127, %v1251
      %v1253 = vpop.f32.mrb[0].mxu0
      %v1254 = vpop.f32.mrb[0].mxu0
      %v1255 = vadd.f32 %v1127, %v1254
      %v1256 = vpop.f32.mrb[0].mxu0
      %1257 = vmatprep.mubr.bf16.mxu0 0
      %1258 = vmatmul.mubr.bf16.gmra.mrb[0].mxu0 %v1096
      %v1259 = vpop.f32.mrb[0].mxu0
      %v1260 = vadd.f32 %v1127, %v1259
      %v1261 = vpop.f32.mrb[0].mxu0
      %v1262 = vpop.f32.mrb[0].mxu0
      %v1263 = vadd.f32 %v1127, %v1262
      %v1264 = vpop.f32.mrb[0].mxu0
      %1265 = vmatprep.mubr.bf16.mxu0 0
      %1266 = vmatmul.mubr.bf16.gmra.mrb[0].mxu0 %v1097
      %v1267 = vpop.f32.mrb[0].mxu0
      %v1268 = vadd.f32 %v1127, %v1267
      %v1269 = vpop.f32.mrb[0].mxu0
      %v1270 = vpop.f32.mrb[0].mxu0
      %v1271 = vadd.f32 %v1127, %v1270
      %v1272 = vpop.f32.mrb[0].mxu0
      %1273 = vmatprep.mubr.bf16.mxu0 0
      %1274 = vmatmul.mubr.bf16.gmra.mrb[0].mxu0 %v1098
      %v1275 = vpop.f32.mrb[0].mxu0
      %v1276 = vadd.f32 %v1127, %v1275
      %v1277 = vpop.f32.mrb[0].mxu0
      %v1278 = vpop.f32.mrb[0].mxu0
      %v1279 = vadd.f32 %v1127, %v1278
      %v1280 = vpop.f32.mrb[0].mxu0
      %1281 = vmatprep.mubr.bf16.mxu0 0
      %1282 = vmatmul.mubr.bf16.gmra.mrb[0].mxu0 %v1099
      %v1283 = vpop.f32.mrb[0].mxu0
      %v1284 = vadd.f32 %v1127, %v1283
      %v1285 = vpop.f32.mrb[0].mxu0
      %v1286 = vpop.f32.mrb[0].mxu0
      %v1287 = vadd.f32 %v1127, %v1286
      %v1288 = vpop.f32.mrb[0].mxu0
      %1289 = vmatprep.mubr.bf16.mxu0 0
      %1290 = vmatmul.mubr.bf16.gmra.mrb[0].mxu0 %v1100
      %v1291 = vpop.f32.mrb[0].mxu0
      %v1292 = vadd.f32 %v1127, %v1291
      %v1293 = vpop.f32.mrb[0].mxu0
      %v1294 = vpop.f32.mrb[0].mxu0
      %v1295 = vadd.f32 %v1127, %v1294
      %v1296 = vpop.f32.mrb[0].mxu0
      %1297 = vmatprep.mubr.bf16.mxu0 0
      %1298 = vmatmul.mubr.bf16.gmra.mrb[0].mxu0 %v1101
      %v1299 = vpop.f32.mrb[0].mxu0
      %v1300 = vadd.f32 %v1127, %v1299
      %v1301 = vpop.f32.mrb[0].mxu0
      %v1302 = vpop.f32.mrb[0].mxu0
      %v1303 = vadd.f32 %v1127, %v1302
      %v1304 = vpop.f32.mrb[0].mxu0
      %1305 = vmatprep.mubr.bf16.mxu0 0
      %1306 = vmatmul.mubr.bf16.gmra.mrb[0].mxu0 %v1102
      %v1307 = vpop.f32.mrb[0].mxu0
      %v1308 = vadd.f32 %v1127, %v1307
      %v1309 = vpop.f32.mrb[0].mxu0
      %v1310 = vpop.f32.mrb[0].mxu0
      %v1311 = vadd.f32 %v1127, %v1310
      %v1312 = vpop.f32.mrb[0].mxu0
      %1313 = vmatprep.mubr.bf16.mxu0 0
      %1314 = vmatmul.mubr.bf16.gmra.mrb[0].mxu0 %v1103
      %v1315 = vpop.f32.mrb[0].mxu0
      %v1316 = vadd.f32 %v1127, %v1315
      %v1317 = vpop.f32.mrb[0].mxu0
      %v1318 = vpop.f32.mrb[0].mxu0
      %v1319 = vadd.f32 %v1127, %v1318
      %v1320 = vpop.f32.mrb[0].mxu0
      %1321 = vmatprep.mubr.bf16.mxu0 0
      %1322 = vmatmul.mubr.bf16.gmra.mrb[0].mxu0 %v1104
      %v1323 = vpop.f32.mrb[0].mxu0
      %v1324 = vadd.f32 %v1127, %v1323
      %v1325 = vpop.f32.mrb[0].mxu0
      %v1326 = vpop.f32.mrb[0].mxu0
      %v1327 = vadd.f32 %v1127, %v1326
      %v1328 = vpop.f32.mrb[0].mxu0
      %1329 = vmatprep.mubr.bf16.mxu0 0
      %1330 = vmatmul.mubr.bf16.gmra.mrb[0].mxu0 %v1105
      %v1331 = vpop.f32.mrb[0].mxu0
      %v1332 = vadd.f32 %v1127, %v1331
      %v1333 = vpop.f32.mrb[0].mxu0
      %v1334 = vpop.f32.mrb[0].mxu0
      %v1335 = vadd.f32 %v1127, %v1334
      %v1336 = vpop.f32.mrb[0].mxu0
      %1337 = vdwg.mxu0
      %1338 = vst [vmem:[%s229] sm:$0xff] %v1212
      %1339 = vst [vmem:[%s229 + $0x8] sm:$0xff] %v1215
      %1340 = vst [vmem:[%s229 + $0x10] sm:$0xff] %v1220
      %1341 = vst [vmem:[%s229 + $0x18] sm:$0xff] %v1223
      %1342 = vst [vmem:[%s229 + $0x20] sm:$0xff] %v1228
      %1343 = vst [vmem:[%s229 + $0x28] sm:$0xff] %v1231
      %1344 = vst [vmem:[%s229 + $0x30] sm:$0xff] %v1236
      %1345 = vst [vmem:[%s229 + $0x38] sm:$0xff] %v1239
      %1346 = vst [vmem:[%s229 + $0x40] sm:$0xff] %v1244
      %1347 = vst [vmem:[%s229 + $0x48] sm:$0xff] %v1247
      %1348 = vst [vmem:[%s229 + $0x50] sm:$0xff] %v1252
      %1349 = vst [vmem:[%s229 + $0x58] sm:$0xff] %v1255
      %1350 = vst [vmem:[%s229 + $0x60] sm:$0xff] %v1260
      %1351 = vst [vmem:[%s229 + $0x68] sm:$0xff] %v1263
      %1352 = vst [vmem:[%s229 + $0x70] sm:$0xff] %v1268
      %1353 = vst [vmem:[%s229 + $0x78] sm:$0xff] %v1271
      %1354 = vst [vmem:[%s229 + $0x80] sm:$0xff] %v1276
      %1355 = vst [vmem:[%s229 + $0x88] sm:$0xff] %v1279
      %1356 = vst [vmem:[%s229 + $0x90] sm:$0xff] %v1284
      %1357 = vst [vmem:[%s229 + $0x98] sm:$0xff] %v1287
      %1358 = vst [vmem:[%s229 + $0xa0] sm:$0xff] %v1292
      %1359 = vst [vmem:[%s229 + $0xa8] sm:$0xff] %v1295
      %1360 = vst [vmem:[%s229 + $0xb0] sm:$0xff] %v1300
      %1361 = vst [vmem:[%s229 + $0xb8] sm:$0xff] %v1303
      %1362 = vst [vmem:[%s229 + $0xc0] sm:$0xff] %v1308
      %1363 = vst [vmem:[%s229 + $0xc8] sm:$0xff] %v1311
      %1364 = vst [vmem:[%s229 + $0xd0] sm:$0xff] %v1316
      %1365 = vst [vmem:[%s229 + $0xd8] sm:$0xff] %v1319
      %1366 = vst [vmem:[%s229 + $0xe0] sm:$0xff] %v1324
      %1367 = vst [vmem:[%s229 + $0xe8] sm:$0xff] %v1327
      %1368 = vst [vmem:[%s229 + $0xf0] sm:$0xff] %v1332
      %1369 = vst [vmem:[%s229 + $0xf8] sm:$0xff] %v1335
      %s1370 = smul.u32 32, %s16
      %p1371 = scmp.lt.s32.totalorder %s1370, 63
      %s1372 = scalar_select %p1371, %s1370, 63
      %s1373 = smul.addr %s1372, 8
      %s1374 = scalar_lea.vmem %s5, %s1373
      // Predicated region
      $region41: #{faster_rcnn_forward.4} parent=39 // pred_check
        %p1375 = pneg %p144
      $region42: #{faster_rcnn_forward.4} parent=39 // pred_check_branch
        %1377 = sbr.rel (%p1375) target = $region44
      $region43: #{faster_rcnn_forward.4} parent=39 // pred_region
        %s1378 = smul.u32 32, %s16
      $region44: #{faster_rcnn_forward.4} parent=39 // pred_fallthru
        _
    $region40: #{faster_rcnn_forward.4} parent=5 // pred_fallthru
      _
    %p1379 = scmp.le.s32.totalorder 2, %s11
    // Predicated region
    $region45: #{faster_rcnn_forward.4} parent=5 // pred_check
      %p1380 = pneg %p1379
    $region46: #{faster_rcnn_forward.4} parent=5 // pred_check_branch
      %1382 = sbr.rel (%p1380) target = $region48
    $region47: #{faster_rcnn_forward.4} parent=5 // pred_region
      %s1383 = ssub.s32 %s11, 2
      // Predicated region
      $region49: #{faster_rcnn_forward.4} parent=47 // pred_check
        %p1384 = pneg %p150
      $region50: #{faster_rcnn_forward.4} parent=47 // pred_check_branch
        %1386 = sbr.rel (%p1384) target = $region52
      $region51: #{faster_rcnn_forward.4} parent=47 // pred_region
        %s1387 = smul.u32 32, %s17
        %p1388 = scmp.lt.s32.totalorder %s1387, 63
        %s1389 = scalar_select %p1388, %s1387, 63
        %s1390 = smul.addr %s1389, 8
        %s1391 = scalar_lea.vmem %s5, %s1390
      $region52: #{faster_rcnn_forward.4} parent=47 // pred_fallthru
        _
    $region48: #{faster_rcnn_forward.4} parent=5 // pred_fallthru
      _
  $region6: #{faster_rcnn_forward.4} parent=0 // loop_footer
    %s15 = sadd.s32 1, %s11
  $region7: #{faster_rcnn_forward.4} parent=0 // loop_footer_branch
    %10 = sbr.rel target = $region3
  $region8: #{faster_rcnn_forward.4} parent=0 // loop_exit
    _

// kernel: faster_rcnn_forward.5
$region0: #{faster_rcnn_forward.5}
  #allocation0 [shape = 'u32[]', space=smem, size = 0x4, offset = 0x4, fixed_abs, tag = 'smem constant byte address 0x4 - core index']
  #allocation1 [shape = 'u32[144,128]{1,0:T(1,128)}', space=vmem, size = 0x12000, scoped, tag = 'internal scratch']
  %s0 = inlined_call_operand.vmem [shape: bf16[8,128], index: 0, kind: input, shape index: {}]
  %s1 = inlined_call_operand.vmem [shape: bf16[128,128], index: 1, kind: input, shape index: {}]
  %s2 = inlined_call_operand.vmem [shape: f32[1,128], index: 2, kind: input, shape index: {}]
  %s3 = inlined_call_operand.vmem [shape: bf16[128,256], index: 3, kind: input, shape index: {}]
  %s4 = inlined_call_operand.vmem [shape: f32[1,256], index: 4, kind: input, shape index: {}]
  %s5 = inlined_call_operand.vmem [shape: f32[1,256], index: 5, kind: input, shape index: {}]
  %s6 = inlined_call_operand.vmem [shape: f32[1,256], index: 6, kind: input, shape index: {}]
  %s7 = inlined_call_operand.vmem [shape: f32[8,256], index: 7, kind: output, shape index: {}]
  %s8 = sld [smem:[#allocation0]]
  $region38: #{faster_rcnn_forward.5} parent=0
    _
  %s10 = ssub.s32 1, %s8
  %s11 = scalar_select 0, %s10, %s8
  // Predicated region
  $region2: #{faster_rcnn_forward.5} parent=0 // pred_check
    _
  $region3: #{faster_rcnn_forward.5} parent=0 // pred_check_branch
    %13 = sbr.rel (0) target = $region5
  $region4: #{faster_rcnn_forward.5} parent=0 // pred_region
    _
  $region5: #{faster_rcnn_forward.5} parent=0 // pred_fallthru
    _
  // Predicated region
  $region6: #{faster_rcnn_forward.5} parent=0 // pred_check
    _
  $region7: #{faster_rcnn_forward.5} parent=0 // pred_check_branch
    %15 = sbr.rel (0) target = $region9
  $region8: #{faster_rcnn_forward.5} parent=0 // pred_region
    _
  $region9: #{faster_rcnn_forward.5} parent=0 // pred_fallthru
    _
  // Predicated region
  $region10: #{faster_rcnn_forward.5} parent=0 // pred_check
    _
  $region11: #{faster_rcnn_forward.5} parent=0 // pred_check_branch
    %17 = sbr.rel (0) target = $region13
  $region12: #{faster_rcnn_forward.5} parent=0 // pred_region
    _
  $region13: #{faster_rcnn_forward.5} parent=0 // pred_fallthru
    _
  // Predicated region
  $region14: #{faster_rcnn_forward.5} parent=0 // pred_check
    _
  $region15: #{faster_rcnn_forward.5} parent=0 // pred_check_branch
    %19 = sbr.rel (0) target = $region17
  $region16: #{faster_rcnn_forward.5} parent=0 // pred_region
    _
  $region17: #{faster_rcnn_forward.5} parent=0 // pred_fallthru
    _
  // Predicated region
  $region18: #{faster_rcnn_forward.5} parent=0 // pred_check
    _
  $region19: #{faster_rcnn_forward.5} parent=0 // pred_check_branch
    %21 = sbr.rel (0) target = $region21
  $region20: #{faster_rcnn_forward.5} parent=0 // pred_region
    _
  $region21: #{faster_rcnn_forward.5} parent=0 // pred_fallthru
    _
  // Predicated region
  $region22: #{faster_rcnn_forward.5} parent=0 // pred_check
    _
  $region23: #{faster_rcnn_forward.5} parent=0 // pred_check_branch
    %23 = sbr.rel (0) target = $region25
  $region24: #{faster_rcnn_forward.5} parent=0 // pred_region
    _
  $region25: #{faster_rcnn_forward.5} parent=0 // pred_fallthru
    _
  // Predicated region
  $region26: #{faster_rcnn_forward.5} parent=0 // pred_check
    _
  $region27: #{faster_rcnn_forward.5} parent=0 // pred_check_branch
    %25 = sbr.rel (0) target = $region29
  $region28: #{faster_rcnn_forward.5} parent=0 // pred_region
    _
  $region29: #{faster_rcnn_forward.5} parent=0 // pred_fallthru
    _
  %v27 = vld [vmem:[%s0] sm:$0xf]
  %v28 = vld [vmem:[%s1] sm:$0xf]
  %v29 = vld [vmem:[%s1 + $0x4] sm:$0xf]
  %v30 = vld [vmem:[%s1 + $0x8] sm:$0xf]
  %v31 = vld [vmem:[%s1 + $0xc] sm:$0xf]
  %v32 = vld [vmem:[%s1 + $0x10] sm:$0xf]
  %v33 = vld [vmem:[%s1 + $0x14] sm:$0xf]
  %v34 = vld [vmem:[%s1 + $0x18] sm:$0xf]
  %v35 = vld [vmem:[%s1 + $0x1c] sm:$0xf]
  %v36 = vld [vmem:[%s1 + $0x20] sm:$0xf]
  %v37 = vld [vmem:[%s1 + $0x24] sm:$0xf]
  %v38 = vld [vmem:[%s1 + $0x28] sm:$0xf]
  %v39 = vld [vmem:[%s1 + $0x2c] sm:$0xf]
  %v40 = vld [vmem:[%s1 + $0x30] sm:$0xf]
  %v41 = vld [vmem:[%s1 + $0x34] sm:$0xf]
  %v42 = vld [vmem:[%s1 + $0x38] sm:$0xf]
  %v43 = vld [vmem:[%s1 + $0x3c] sm:$0xf]
  %v44 = vld [vmem:[%s2] sm:$0x1]
  %v46 = vlaneseq
  %v47 = vshrl.u32 %v46, 7
  %v48 = vsub.s32 0, %v47
  %v49 = vrot.slane %v44, %v48
  %v67 = vunpack.c.l.b16 %v28
  %v68 = vunpack.c.l.b16 %v29
  %v69 = vunpack.c.l.b16 %v30
  %v70 = vunpack.c.l.b16 %v31
  %v71 = vunpack.c.l.b16 %v32
  %v72 = vunpack.c.l.b16 %v33
  %v73 = vunpack.c.l.b16 %v34
  %v74 = vunpack.c.l.b16 %v35
  %v75 = vunpack.c.l.b16 %v36
  %v76 = vunpack.c.l.b16 %v37
  %v77 = vunpack.c.l.b16 %v38
  %v78 = vunpack.c.l.b16 %v39
  %v79 = vunpack.c.l.b16 %v40
  %v80 = vunpack.c.l.b16 %v41
  %v81 = vunpack.c.l.b16 %v42
  %v82 = vunpack.c.l.b16 %v43
  %v83 = vpack.c.b16 %v68, %v67
  %v84 = vpack.c.b16 %v70, %v69
  %v85 = vpack.c.b16 %v72, %v71
  %v86 = vpack.c.b16 %v74, %v73
  %v87 = vpack.c.b16 %v76, %v75
  %v88 = vpack.c.b16 %v78, %v77
  %v89 = vpack.c.b16 %v80, %v79
  %v90 = vpack.c.b16 %v82, %v81
  %99 = vmatprep.subr.bf16.mxu0 0
  %100 = vmatpush1.bf16.msra.mxu0 %v83
  %101 = vmatprep.subr.bf16.mxu0 0
  %102 = vmatpush1.bf16.msra.mxu0 %v84
  %103 = vmatprep.subr.bf16.mxu0 0
  %104 = vmatpush1.bf16.msra.mxu0 %v85
  %105 = vmatprep.subr.bf16.mxu0 0
  %106 = vmatpush1.bf16.msra.mxu0 %v86
  %107 = vmatprep.subr.bf16.mxu0 0
  %108 = vmatpush1.bf16.msra.mxu0 %v87
  %109 = vmatprep.subr.bf16.mxu0 0
  %110 = vmatpush1.bf16.msra.mxu0 %v88
  %111 = vmatprep.subr.bf16.mxu0 0
  %112 = vmatpush1.bf16.msra.mxu0 %v89
  %113 = vmatprep.subr.bf16.mxu0 0
  %114 = vmatpush1.bf16.msra.mxu0 %v90
  %115 = vmatprep.subr.bf16.mxu0 0
  %116 = vmatpush1.bf16.msra.mxu0 0
  %117 = vmatprep.subr.bf16.mxu0 0
  %118 = vmatpush1.bf16.msra.mxu0 0
  %119 = vmatprep.subr.bf16.mxu0 0
  %120 = vmatpush1.bf16.msra.mxu0 0
  %121 = vmatprep.subr.bf16.mxu0 0
  %122 = vmatpush1.bf16.msra.mxu0 0
  %123 = vmatprep.subr.bf16.mxu0 0
  %124 = vmatpush1.bf16.msra.mxu0 0
  %125 = vmatprep.subr.bf16.mxu0 0
  %126 = vmatpush1.bf16.msra.mxu0 0
  %127 = vmatprep.subr.bf16.mxu0 0
  %128 = vmatpush1.bf16.msra.mxu0 0
  %129 = vmatprep.subr.bf16.mxu0 0
  %130 = vmatpush1.bf16.msra.mxu0 0
  %131 = vmatprep.mubr.bf16.mxu0 0
  %132 = vmatmul.mubr.bf16.gmra.mrb[0].mxu0 %v27
  %v133 = vpop.f32.mrb[0].mxu0
  %v134 = vadd.f32 %v49, %v133
  %v135 = vpop.f32.mrb[0].mxu0
  %v136 = vpop.f32.mrb[0].mxu0
  %v137 = vpop.f32.mrb[0].mxu0
  %138 = vdwg.mxu0
  %v139 = vmax.f32 %v134, 0.0
  %v140 = vpack.c.bf16 %v139, %v139
  %v141 = vld [vmem:[%s3] sm:$0xff]
  %v142 = vld [vmem:[%s3 + $0x8] sm:$0xff]
  %v143 = vld [vmem:[%s3 + $0x10] sm:$0xff]
  %v144 = vld [vmem:[%s3 + $0x18] sm:$0xff]
  %v145 = vld [vmem:[%s3 + $0x20] sm:$0xff]
  %v146 = vld [vmem:[%s3 + $0x28] sm:$0xff]
  %v147 = vld [vmem:[%s3 + $0x30] sm:$0xff]
  %v148 = vld [vmem:[%s3 + $0x38] sm:$0xff]
  %v149 = vld [vmem:[%s3 + $0x40] sm:$0xff]
  %v150 = vld [vmem:[%s3 + $0x48] sm:$0xff]
  %v151 = vld [vmem:[%s3 + $0x50] sm:$0xff]
  %v152 = vld [vmem:[%s3 + $0x58] sm:$0xff]
  %v153 = vld [vmem:[%s3 + $0x60] sm:$0xff]
  %v154 = vld [vmem:[%s3 + $0x68] sm:$0xff]
  %v155 = vld [vmem:[%s3 + $0x70] sm:$0xff]
  %v156 = vld [vmem:[%s3 + $0x78] sm:$0xff]
  %v157 = vld [vmem:[%s4] sm:$0x3]
  %v159 = vlaneseq
  %v160 = vshrl.u32 %v159, 7
  %v161 = vsub.s32 0, %v160
  %v162 = vrot.slane %v157, %v161
  %v163 = vlaneseq
  %v164 = vshrl.u32 %v163, 7
  %v165 = vsub.s32 1, %v164
  %v166 = vrot.slane %v157, %v165
  %v185 = vunpack.c.l.b16 %v141
  %v186 = vunpack.c.h.b16 %v141
  %v187 = vunpack.c.l.b16 %v142
  %v188 = vunpack.c.h.b16 %v142
  %v189 = vunpack.c.l.b16 %v143
  %v190 = vunpack.c.h.b16 %v143
  %v191 = vunpack.c.l.b16 %v144
  %v192 = vunpack.c.h.b16 %v144
  %v193 = vunpack.c.l.b16 %v145
  %v194 = vunpack.c.h.b16 %v145
  %v195 = vunpack.c.l.b16 %v146
  %v196 = vunpack.c.h.b16 %v146
  %v197 = vunpack.c.l.b16 %v147
  %v198 = vunpack.c.h.b16 %v147
  %v199 = vunpack.c.l.b16 %v148
  %v200 = vunpack.c.h.b16 %v148
  %v201 = vunpack.c.l.b16 %v149
  %v202 = vunpack.c.h.b16 %v149
  %v203 = vunpack.c.l.b16 %v150
  %v204 = vunpack.c.h.b16 %v150
  %v205 = vunpack.c.l.b16 %v151
  %v206 = vunpack.c.h.b16 %v151
  %v207 = vunpack.c.l.b16 %v152
  %v208 = vunpack.c.h.b16 %v152
  %v209 = vunpack.c.l.b16 %v153
  %v210 = vunpack.c.h.b16 %v153
  %v211 = vunpack.c.l.b16 %v154
  %v212 = vunpack.c.h.b16 %v154
  %v213 = vunpack.c.l.b16 %v155
  %v214 = vunpack.c.h.b16 %v155
  %v215 = vunpack.c.l.b16 %v156
  %v216 = vunpack.c.h.b16 %v156
  %v217 = vpack.c.b16 %v187, %v185
  %v218 = vpack.c.b16 %v188, %v186
  %v219 = vpack.c.b16 %v191, %v189
  %v220 = vpack.c.b16 %v192, %v190
  %v221 = vpack.c.b16 %v195, %v193
  %v222 = vpack.c.b16 %v196, %v194
  %v223 = vpack.c.b16 %v199, %v197
  %v224 = vpack.c.b16 %v200, %v198
  %v225 = vpack.c.b16 %v203, %v201
  %v226 = vpack.c.b16 %v204, %v202
  %v227 = vpack.c.b16 %v207, %v205
  %v228 = vpack.c.b16 %v208, %v206
  %v229 = vpack.c.b16 %v211, %v209
  %v230 = vpack.c.b16 %v212, %v210
  %v231 = vpack.c.b16 %v215, %v213
  %v232 = vpack.c.b16 %v216, %v214
  %249 = vmatprep.subr.bf16.mxu0 %v218
  %250 = vmatpush1.bf16.msra.mxu0 %v217
  %251 = vmatprep.subr.bf16.mxu0 %v220
  %252 = vmatpush1.bf16.msra.mxu0 %v219
  %253 = vmatprep.subr.bf16.mxu0 %v222
  %254 = vmatpush1.bf16.msra.mxu0 %v221
  %255 = vmatprep.subr.bf16.mxu0 %v224
  %256 = vmatpush1.bf16.msra.mxu0 %v223
  %257 = vmatprep.subr.bf16.mxu0 %v226
  %258 = vmatpush1.bf16.msra.mxu0 %v225
  %259 = vmatprep.subr.bf16.mxu0 %v228
  %260 = vmatpush1.bf16.msra.mxu0 %v227
  %261 = vmatprep.subr.bf16.mxu0 %v230
  %262 = vmatpush1.bf16.msra.mxu0 %v229
  %263 = vmatprep.subr.bf16.mxu0 %v232
  %264 = vmatpush1.bf16.msra.mxu0 %v231
  %265 = vmatprep.subr.bf16.mxu0 0
  %266 = vmatpush1.bf16.msra.mxu0 0
  %267 = vmatprep.subr.bf16.mxu0 0
  %268 = vmatpush1.bf16.msra.mxu0 0
  %269 = vmatprep.subr.bf16.mxu0 0
  %270 = vmatpush1.bf16.msra.mxu0 0
  %271 = vmatprep.subr.bf16.mxu0 0
  %272 = vmatpush1.bf16.msra.mxu0 0
  %273 = vmatprep.subr.bf16.mxu0 0
  %274 = vmatpush1.bf16.msra.mxu0 0
  %275 = vmatprep.subr.bf16.mxu0 0
  %276 = vmatpush1.bf16.msra.mxu0 0
  %277 = vmatprep.subr.bf16.mxu0 0
  %278 = vmatpush1.bf16.msra.mxu0 0
  %279 = vmatprep.subr.bf16.mxu0 0
  %280 = vmatpush1.bf16.msra.mxu0 0
  %281 = vmatprep.mubr.bf16.mxu0 0
  %282 = vmatmul.mubr.bf16.gmra.mrb[0].mxu0 %v140
  %v283 = vpop.f32.mrb[0].mxu0
  %v284 = vadd.f32 %v162, %v283
  %v285 = vpop.f32.mrb[0].mxu0
  %v286 = vadd.f32 %v166, %v285
  %v287 = vpop.f32.mrb[0].mxu0
  %v288 = vpop.f32.mrb[0].mxu0
  %289 = vdwg.mxu0
  %v290 = vld [vmem:[%s5] sm:$0x3]
  %v292 = vlaneseq
  %v293 = vshrl.u32 %v292, 7
  %v294 = vsub.s32 0, %v293
  %v295 = vrot.slane %v290, %v294
  %v296 = vlaneseq
  %v297 = vshrl.u32 %v296, 7
  %v298 = vsub.s32 1, %v297
  %v299 = vrot.slane %v290, %v298
  %v302 = vmul.f32 %v284, %v295
  %v303 = vmul.f32 %v286, %v299
  %v304 = vld [vmem:[%s6] sm:$0x3]
  %v306 = vlaneseq
  %v307 = vshrl.u32 %v306, 7
  %v308 = vsub.s32 0, %v307
  %v309 = vrot.slane %v304, %v308
  %v310 = vlaneseq
  %v311 = vshrl.u32 %v310, 7
  %v312 = vsub.s32 1, %v311
  %v313 = vrot.slane %v304, %v312
  %v316 = vadd.f32 %v302, %v309
  %v317 = vadd.f32 %v303, %v313
  %318 = vst [vmem:[%s7] sm:$0xff] %v316
  %319 = vst [vmem:[%s7 + $0x8] sm:$0xff] %v317
  // Predicated region
  $region30: #{faster_rcnn_forward.5} parent=0 // pred_check
    _
  $region31: #{faster_rcnn_forward.5} parent=0 // pred_check_branch
    %321 = sbr.rel (0) target = $region33
  $region32: #{faster_rcnn_forward.5} parent=0 // pred_region
    _
  $region33: #{faster_rcnn_forward.5} parent=0 // pred_fallthru
    _
  // Predicated region
  $region34: #{faster_rcnn_forward.5} parent=0 // pred_check
    _
  $region35: #{faster_rcnn_forward.5} parent=0 // pred_check_branch
    %323 = sbr.rel (0) target = $region37
  $region36: #{faster_rcnn_forward.5} parent=0 // pred_region
    _
  $region37: #{faster_rcnn_forward.5} parent=0 // pred_fallthru
    _

</llo_original>
